<compile_context>
chip_gen: v6e
topology: v6e:2x2x1
jax: 0.10.0
libtpu: 0.0.40
codegen_flags: <defaults>
</compile_context>

<pallas_src>
import functools
import math

import jax
import jax.numpy as jnp
from jax import lax
from jax.experimental import pallas as pl
from jax.experimental.pallas import tpu as pltpu


def _round_up(n, m):
    return ((n + m - 1) // m) * m


def _mha_kernel(xq_ref, xf_ref, mem_ref,
                wq_ref, bq_ref, wk_ref, bk_ref, wv_ref, bv_ref,
                wo_ref, bo_ref, out_ref,
                *, num_head, compute_dtype):
    """One (batch, q-row-tile) step of fused multi-head attention.

    xq_ref  : (tq, in_dim)       query rows of this tile (from x)
    xf_ref  : (Sk, in_dim)       full x rows of this batch (value source)
    mem_ref : (Sk, key_dim)      full mem rows of this batch (key source)
    wq_ref  : (in_dim, in_dim)   bq_ref: (1, in_dim)
    wk_ref  : (key_dim, in_dim)  bk_ref: (1, in_dim)
    wv_ref  : (in_dim, in_dim)   bv_ref: (1, in_dim)
    wo_ref  : (in_dim, out_pad)  bo_ref: (1, out_pad)   (out lanes zero-padded)
    out_ref : (tq, out_pad)      lane-dense output slab
    """
    cd = compute_dtype
    in_dim = wq_ref.shape[0]
    dh = in_dim // num_head
    scale = 1.0 / math.sqrt(dh)

    # Projections: three MXU matmuls, f32 accumulation.
    q = jnp.dot(xq_ref[...].astype(cd), wq_ref[...].astype(cd),
                preferred_element_type=jnp.float32) + bq_ref[...]      # (tq, in)
    k = jnp.dot(mem_ref[...].astype(cd), wk_ref[...].astype(cd),
                preferred_element_type=jnp.float32) + bk_ref[...]      # (Sk, in)
    v = jnp.dot(xf_ref[...].astype(cd), wv_ref[...].astype(cd),
                preferred_element_type=jnp.float32) + bv_ref[...]      # (Sk, in)

    # Per-head attention with real lane slices (contract dh, output dh).
    # Static loop: num_head is small; slices are free when dh % 128 == 0.
    heads = []
    for h in range(num_head):
        lo = h * dh
        qh = q[:, lo:lo + dh].astype(cd)                               # (tq, dh)
        kh = k[:, lo:lo + dh].astype(cd)                               # (Sk, dh)
        vh = v[:, lo:lo + dh].astype(cd)                               # (Sk, dh)

        # scores = Qh @ Kh^T : contract the feature dim of both operands
        # (A @ B^T form, no XLU transpose).
        s = lax.dot_general(qh, kh, (((1,), (1,)), ((), ())),
                            preferred_element_type=jnp.float32) * scale  # (tq, Sk)
        s = s - jnp.max(s, axis=-1, keepdims=True)
        p = jnp.exp(s)
        p = p * pl.reciprocal(jnp.sum(p, axis=-1, keepdims=True), approx=True)

        heads.append(jnp.dot(p.astype(cd), vh,
                             preferred_element_type=jnp.float32))      # (tq, dh)

    o = jnp.concatenate(heads, axis=-1)                                # (tq, in)
    act = jnp.maximum(o, 0.0)                                          # F.relu
    out = jnp.dot(act.astype(cd), wo_ref[...].astype(cd),
                  preferred_element_type=jnp.float32) + bo_ref[...]    # (tq, out_pad)
    out_ref[...] = out.astype(out_ref.dtype)


def prepare_weights(params, out_dim):
    """One-time weight prep (NOT per-forward): lane-pad only the output width."""
    out_pad = _round_up(out_dim, 128)
    wo = jnp.zeros((params["wo"].shape[0], out_pad), jnp.float32)
    wo = wo.at[:, :out_dim].set(params["wo"])
    bo = jnp.zeros((1, out_pad), jnp.float32).at[:, :out_dim].set(params["bo"])
    prepared = dict(params)
    prepared["wo_pad"] = wo
    prepared["bo_pad"] = bo
    prepared["out_dim"] = out_dim
    return prepared


def multi_head_attention(x, mem, prepared, num_head, *, compute_dtype=jnp.float32):
    """x: (B, Sq, in_dim) f32, mem: (B, Sk, key_dim) f32 -> (B, Sq, out_dim) f32."""
    B, Sq, in_dim = x.shape
    Bm, Sk, key_dim = mem.shape
    out_dim = prepared["out_dim"]
    out_pad = prepared["wo_pad"].shape[1]
    assert Bm == B
    assert in_dim % num_head == 0, "in_dim must be divisible by num_head"
    # TODO(synk): V is projected from x (as the module's __init__ implies), so
    #             the attention contraction requires Sq == Sk.
    assert Sq == Sk, "inferred module semantics require Sq == Sk"

    # Query-row tile: full Sq at small sizes, 256-row tiles when it divides.
    tq = 256 if (Sq % 256 == 0) else Sq
    grid = (B, Sq // tq)

    kernel = functools.partial(_mha_kernel, num_head=num_head,
                               compute_dtype=compute_dtype)

    in_specs = [
        # x, blocked by (batch, q-row tile) — query rows of this step.
        pl.BlockSpec((None, tq, in_dim), lambda b, j: (b, j, 0)),
        # x, whole batch — value source.
        pl.BlockSpec((None, Sq, in_dim), lambda b, j: (b, 0, 0)),
        # mem, whole batch — key source.
        pl.BlockSpec((None, Sk, key_dim), lambda b, j: (b, 0, 0)),
        # weights / biases: whole, replicated across the grid.
        pl.BlockSpec((in_dim, in_dim), lambda b, j: (0, 0)),   # wq
        pl.BlockSpec((1, in_dim), lambda b, j: (0, 0)),        # bq
        pl.BlockSpec((key_dim, in_dim), lambda b, j: (0, 0)),  # wk
        pl.BlockSpec((1, in_dim), lambda b, j: (0, 0)),        # bk
        pl.BlockSpec((in_dim, in_dim), lambda b, j: (0, 0)),   # wv
        pl.BlockSpec((1, in_dim), lambda b, j: (0, 0)),        # bv
        pl.BlockSpec((in_dim, out_pad), lambda b, j: (0, 0)),  # wo (out-lane padded)
        pl.BlockSpec((1, out_pad), lambda b, j: (0, 0)),       # bo
    ]
    out_specs = pl.BlockSpec((None, tq, out_pad), lambda b, j: (b, j, 0))

    out_full = pl.pallas_call(
        kernel,
        out_shape=jax.ShapeDtypeStruct((B, Sq, out_pad), jnp.float32),
        grid=grid,
        in_specs=in_specs,
        out_specs=out_specs,
        compiler_params=pltpu.CompilerParams(
            # Both grid axes are independent: shard across TCs on v7x.
            dimension_semantics=("parallel", "parallel"),
            # Raise v5e's 16 MiB scoped default; safely below v7x's 64 MiB.
            vmem_limit_bytes=32 * 1024 * 1024,
        ),
    )(x, x, mem,
      prepared["wq"], prepared["bq"],
      prepared["wk"], prepared["bk"],
      prepared["wv"], prepared["bv"],
      prepared["wo_pad"], prepared["bo_pad"])

    return out_full[:, :, :out_dim]


def reference(x, mem, params, num_head):
    """Pure-JAX f32 reference of the same math for correctness checking."""
    q = x @ params["wq"] + params["bq"]
    k = mem @ params["wk"] + params["bk"]
    v = x @ params["wv"] + params["bv"]
    B, Sq, D = q.shape
    Sk = k.shape[1]
    dh = D // num_head
    qh = q.reshape(B, Sq, num_head, dh).transpose(0, 2, 1, 3)
    kh = k.reshape(B, Sk, num_head, dh).transpose(0, 2, 1, 3)
    vh = v.reshape(B, Sq, num_head, dh).transpose(0, 2, 1, 3)
    s = jnp.einsum("bhqd,bhkd->bhqk", qh, kh) / math.sqrt(dh)
    p = jax.nn.softmax(s, axis=-1)
    o = jnp.einsum("bhqk,bhkd->bhqd", p, vh).transpose(0, 2, 1, 3).reshape(B, Sq, D)
    return jnp.maximum(o, 0.0) @ params["wo"] + params["bo"]


def init_params(key, in_dim, key_dim, out_dim):
    """Deterministic parameter init (PyTorch nn.Linear shapes, stored transposed)."""
    ks = jax.random.split(key, 8)

    def lin(kw, kb, d_in, d_out):
        bound = 1.0 / math.sqrt(d_in)
        w = jax.random.uniform(kw, (d_in, d_out), jnp.float32, -bound, bound)
        b = jax.random.uniform(kb, (1, d_out), jnp.float32, -bound, bound)
        return w, b

    wq, bq = lin(ks[0], ks[1], in_dim, in_dim)
    wk, bk = lin(ks[2], ks[3], key_dim, in_dim)
    wv, bv = lin(ks[4], ks[5], in_dim, in_dim)
    wo, bo = lin(ks[6], ks[7], in_dim, out_dim)
    return dict(wq=wq, bq=bq, wk=wk, bk=bk, wv=wv, bv=bv, wo=wo, bo=bo)


if __name__ == "__main__":
    B, Sq, Sk = 2, 8, 8
    in_dim, key_dim, out_dim, num_head = 32, 16, 32, 4

    root = jax.random.PRNGKey(0)
    kx, kmem, kparam = jax.random.split(root, 3)
    x = jax.random.normal(kx, (B, Sq, in_dim), jnp.float32)
    mem = jax.random.normal(kmem, (B, Sk, key_dim), jnp.float32)
    params = init_params(kparam, in_dim, key_dim, out_dim)
    prepared = prepare_weights(params, out_dim)     # one-time, not per-forward

    ref = reference(x, mem, params, num_head)

    # f32 matmul path.
    out = multi_head_attention(x, mem, prepared, num_head)
    out = jax.block_until_ready(out)
    assert out.shape == (B, Sq, out_dim)
    assert jnp.allclose(out, ref, atol=5e-3, rtol=5e-3), "f32 kernel mismatch vs reference"

    # bf16 MXU path (recommended on v5e/v6e/v7x); f32 accumulation, f32 softmax.
    out_bf16 = multi_head_attention(x, mem, prepared, num_head,
                                    compute_dtype=jnp.bfloat16)
    out_bf16 = jax.block_until_ready(out_bf16)
    assert jnp.allclose(out_bf16, ref, atol=5e-2, rtol=5e-2), "bf16 kernel mismatch vs reference"

    print("KERNEL_OK")
</pallas_src>

<mosaic_0001>
module attributes {stable_mosaic.version = 11 : i64} {
  func.func @_mha_kernel(%arg0: i32, %arg1: i32, %arg2: memref<1x8x32xf32, #tpu.memory_space<vmem>>, %arg3: memref<1x8x32xf32, #tpu.memory_space<vmem>>, %arg4: memref<1x8x16xf32, #tpu.memory_space<vmem>>, %arg5: memref<32x32xf32, #tpu.memory_space<vmem>>, %arg6: memref<1x32xf32, #tpu.memory_space<vmem>>, %arg7: memref<16x32xf32, #tpu.memory_space<vmem>>, %arg8: memref<1x32xf32, #tpu.memory_space<vmem>>, %arg9: memref<32x32xf32, #tpu.memory_space<vmem>>, %arg10: memref<1x32xf32, #tpu.memory_space<vmem>>, %arg11: memref<32x128xf32, #tpu.memory_space<vmem>>, %arg12: memref<1x128xf32, #tpu.memory_space<vmem>>, %arg13: memref<1x8x128xf32, #tpu.memory_space<vmem>>) attributes {dimension_semantics = [#tpu.dimension_semantics<parallel>, #tpu.dimension_semantics<parallel>], iteration_bounds = array<i64: 2, 1>, scalar_prefetch = 0 : i64, scratch_operands = 0 : i64, tpu.core_type = #tpu.core_type<tc>, window_params = [{transform_indices = @transform_0, window_bounds = array<i64: 1, 8, 32>}, {transform_indices = @transform_1, window_bounds = array<i64: 1, 8, 32>}, {transform_indices = @transform_2, window_bounds = array<i64: 1, 8, 16>}, {pipeline_mode = #tpu.pipeline_mode<synchronous>, transform_indices = @transform_3, window_bounds = array<i64: 32, 32>}, {pipeline_mode = #tpu.pipeline_mode<synchronous>, transform_indices = @transform_4, window_bounds = array<i64: 1, 32>}, {pipeline_mode = #tpu.pipeline_mode<synchronous>, transform_indices = @transform_5, window_bounds = array<i64: 16, 32>}, {pipeline_mode = #tpu.pipeline_mode<synchronous>, transform_indices = @transform_6, window_bounds = array<i64: 1, 32>}, {pipeline_mode = #tpu.pipeline_mode<synchronous>, transform_indices = @transform_7, window_bounds = array<i64: 32, 32>}, {pipeline_mode = #tpu.pipeline_mode<synchronous>, transform_indices = @transform_8, window_bounds = array<i64: 1, 32>}, {pipeline_mode = #tpu.pipeline_mode<synchronous>, transform_indices = @transform_9, window_bounds = array<i64: 32, 128>}, {pipeline_mode = #tpu.pipeline_mode<synchronous>, transform_indices = @transform_10, window_bounds = array<i64: 1, 128>}, {transform_indices = @transform_11, window_bounds = array<i64: 1, 8, 128>}]} {
    %c0 = arith.constant 0 : index
    %c0_0 = arith.constant 0 : index
    %c0_1 = arith.constant 0 : index
    %0 = vector.load %arg2[%c0, %c0_0, %c0_1] : memref<1x8x32xf32, #tpu.memory_space<vmem>>, vector<1x8x32xf32>
    %1 = vector.shape_cast %0 : vector<1x8x32xf32> to vector<8x32xf32>
    %c0_2 = arith.constant 0 : index
    %c0_3 = arith.constant 0 : index
    %2 = vector.load %arg5[%c0_2, %c0_3] : memref<32x32xf32, #tpu.memory_space<vmem>>, vector<32x32xf32>
    %cst = arith.constant dense<0.000000e+00> : vector<8x32xf32>
    %3 = tpu.matmul %1, %2, %cst {dimension_numbers = #tpu.dot_dimension_numbers<[1], [0], [0], [1], [0, 0, 1, 1], [], []>} : vector<8x32xf32>, vector<32x32xf32>, vector<8x32xf32> -> vector<8x32xf32>
    %c0_4 = arith.constant 0 : index
    %c0_5 = arith.constant 0 : index
    %4 = vector.load %arg6[%c0_4, %c0_5] : memref<1x32xf32, #tpu.memory_space<vmem>>, vector<1x32xf32>
    %5 = vector.broadcast %4 : vector<1x32xf32> to vector<8x32xf32>
    %6 = arith.addf %3, %5 : vector<8x32xf32>
    %c0_6 = arith.constant 0 : index
    %c0_7 = arith.constant 0 : index
    %c0_8 = arith.constant 0 : index
    %7 = vector.load %arg4[%c0_6, %c0_7, %c0_8] : memref<1x8x16xf32, #tpu.memory_space<vmem>>, vector<1x8x16xf32>
    %8 = vector.shape_cast %7 : vector<1x8x16xf32> to vector<8x16xf32>
    %c0_9 = arith.constant 0 : index
    %c0_10 = arith.constant 0 : index
    %9 = vector.load %arg7[%c0_9, %c0_10] : memref<16x32xf32, #tpu.memory_space<vmem>>, vector<16x32xf32>
    %cst_11 = arith.constant dense<0.000000e+00> : vector<8x32xf32>
    %10 = tpu.matmul %8, %9, %cst_11 {dimension_numbers = #tpu.dot_dimension_numbers<[1], [0], [0], [1], [0, 0, 1, 1], [], []>} : vector<8x16xf32>, vector<16x32xf32>, vector<8x32xf32> -> vector<8x32xf32>
    %c0_12 = arith.constant 0 : index
    %c0_13 = arith.constant 0 : index
    %11 = vector.load %arg8[%c0_12, %c0_13] : memref<1x32xf32, #tpu.memory_space<vmem>>, vector<1x32xf32>
    %12 = vector.broadcast %11 : vector<1x32xf32> to vector<8x32xf32>
    %13 = arith.addf %10, %12 : vector<8x32xf32>
    %c0_14 = arith.constant 0 : index
    %c0_15 = arith.constant 0 : index
    %c0_16 = arith.constant 0 : index
    %14 = vector.load %arg3[%c0_14, %c0_15, %c0_16] : memref<1x8x32xf32, #tpu.memory_space<vmem>>, vector<1x8x32xf32>
    %15 = vector.shape_cast %14 : vector<1x8x32xf32> to vector<8x32xf32>
    %c0_17 = arith.constant 0 : index
    %c0_18 = arith.constant 0 : index
    %16 = vector.load %arg9[%c0_17, %c0_18] : memref<32x32xf32, #tpu.memory_space<vmem>>, vector<32x32xf32>
    %cst_19 = arith.constant dense<0.000000e+00> : vector<8x32xf32>
    %17 = tpu.matmul %15, %16, %cst_19 {dimension_numbers = #tpu.dot_dimension_numbers<[1], [0], [0], [1], [0, 0, 1, 1], [], []>} : vector<8x32xf32>, vector<32x32xf32>, vector<8x32xf32> -> vector<8x32xf32>
    %c0_20 = arith.constant 0 : index
    %c0_21 = arith.constant 0 : index
    %18 = vector.load %arg10[%c0_20, %c0_21] : memref<1x32xf32, #tpu.memory_space<vmem>>, vector<1x32xf32>
    %19 = vector.broadcast %18 : vector<1x32xf32> to vector<8x32xf32>
    %20 = arith.addf %17, %19 : vector<8x32xf32>
    %21 = vector.extract_strided_slice %6 {offsets = [0, 0], sizes = [8, 8], strides = [1, 1]} : vector<8x32xf32> to vector<8x8xf32>
    %22 = vector.extract_strided_slice %13 {offsets = [0, 0], sizes = [8, 8], strides = [1, 1]} : vector<8x32xf32> to vector<8x8xf32>
    %23 = vector.extract_strided_slice %20 {offsets = [0, 0], sizes = [8, 8], strides = [1, 1]} : vector<8x32xf32> to vector<8x8xf32>
    %cst_22 = arith.constant dense<0.000000e+00> : vector<8x8xf32>
    %24 = tpu.matmul %21, %22, %cst_22 {dimension_numbers = #tpu.dot_dimension_numbers<[1], [1], [0], [0], [0, 0, 1, 0], [], []>} : vector<8x8xf32>, vector<8x8xf32>, vector<8x8xf32> -> vector<8x8xf32>
    %cst_23 = arith.constant 0.353553385 : f32
    %25 = vector.broadcast %cst_23 : f32 to vector<8x8xf32>
    %26 = arith.mulf %24, %25 : vector<8x8xf32>
    %cst_24 = arith.constant dense<0xFF800000> : vector<8xf32>
    %27 = vector.multi_reduction <maximumf>, %26, %cst_24 [1] : vector<8x8xf32> to vector<8xf32>
    %28 = vector.shape_cast %27 : vector<8xf32> to vector<8x1xf32>
    %29 = vector.broadcast %28 : vector<8x1xf32> to vector<8x8xf32>
    %30 = arith.subf %26, %29 : vector<8x8xf32>
    %31 = math.exp %30 : vector<8x8xf32>
    %cst_25 = arith.constant dense<0.000000e+00> : vector<8xf32>
    %32 = vector.multi_reduction <add>, %31, %cst_25 [1] : vector<8x8xf32> to vector<8xf32>
    %33 = vector.shape_cast %32 : vector<8xf32> to vector<8x1xf32>
    %34 = tpu.reciprocal %33 {approx = true} : vector<8x1xf32> -> vector<8x1xf32>
    %35 = vector.broadcast %34 : vector<8x1xf32> to vector<8x8xf32>
    %36 = arith.mulf %31, %35 : vector<8x8xf32>
    %cst_26 = arith.constant dense<0.000000e+00> : vector<8x8xf32>
    %37 = tpu.matmul %36, %23, %cst_26 {dimension_numbers = #tpu.dot_dimension_numbers<[1], [0], [0], [1], [0, 0, 1, 1], [], []>} : vector<8x8xf32>, vector<8x8xf32>, vector<8x8xf32> -> vector<8x8xf32>
    %38 = vector.extract_strided_slice %6 {offsets = [0, 8], sizes = [8, 8], strides = [1, 1]} : vector<8x32xf32> to vector<8x8xf32>
    %39 = vector.extract_strided_slice %13 {offsets = [0, 8], sizes = [8, 8], strides = [1, 1]} : vector<8x32xf32> to vector<8x8xf32>
    %40 = vector.extract_strided_slice %20 {offsets = [0, 8], sizes = [8, 8], strides = [1, 1]} : vector<8x32xf32> to vector<8x8xf32>
    %cst_27 = arith.constant dense<0.000000e+00> : vector<8x8xf32>
    %41 = tpu.matmul %38, %39, %cst_27 {dimension_numbers = #tpu.dot_dimension_numbers<[1], [1], [0], [0], [0, 0, 1, 0], [], []>} : vector<8x8xf32>, vector<8x8xf32>, vector<8x8xf32> -> vector<8x8xf32>
    %cst_28 = arith.constant 0.353553385 : f32
    %42 = vector.broadcast %cst_28 : f32 to vector<8x8xf32>
    %43 = arith.mulf %41, %42 : vector<8x8xf32>
    %cst_29 = arith.constant dense<0xFF800000> : vector<8xf32>
    %44 = vector.multi_reduction <maximumf>, %43, %cst_29 [1] : vector<8x8xf32> to vector<8xf32>
    %45 = vector.shape_cast %44 : vector<8xf32> to vector<8x1xf32>
    %46 = vector.broadcast %45 : vector<8x1xf32> to vector<8x8xf32>
    %47 = arith.subf %43, %46 : vector<8x8xf32>
    %48 = math.exp %47 : vector<8x8xf32>
    %cst_30 = arith.constant dense<0.000000e+00> : vector<8xf32>
    %49 = vector.multi_reduction <add>, %48, %cst_30 [1] : vector<8x8xf32> to vector<8xf32>
    %50 = vector.shape_cast %49 : vector<8xf32> to vector<8x1xf32>
    %51 = tpu.reciprocal %50 {approx = true} : vector<8x1xf32> -> vector<8x1xf32>
    %52 = vector.broadcast %51 : vector<8x1xf32> to vector<8x8xf32>
    %53 = arith.mulf %48, %52 : vector<8x8xf32>
    %cst_31 = arith.constant dense<0.000000e+00> : vector<8x8xf32>
    %54 = tpu.matmul %53, %40, %cst_31 {dimension_numbers = #tpu.dot_dimension_numbers<[1], [0], [0], [1], [0, 0, 1, 1], [], []>} : vector<8x8xf32>, vector<8x8xf32>, vector<8x8xf32> -> vector<8x8xf32>
    %55 = vector.extract_strided_slice %6 {offsets = [0, 16], sizes = [8, 8], strides = [1, 1]} : vector<8x32xf32> to vector<8x8xf32>
    %56 = vector.extract_strided_slice %13 {offsets = [0, 16], sizes = [8, 8], strides = [1, 1]} : vector<8x32xf32> to vector<8x8xf32>
    %57 = vector.extract_strided_slice %20 {offsets = [0, 16], sizes = [8, 8], strides = [1, 1]} : vector<8x32xf32> to vector<8x8xf32>
    %cst_32 = arith.constant dense<0.000000e+00> : vector<8x8xf32>
    %58 = tpu.matmul %55, %56, %cst_32 {dimension_numbers = #tpu.dot_dimension_numbers<[1], [1], [0], [0], [0, 0, 1, 0], [], []>} : vector<8x8xf32>, vector<8x8xf32>, vector<8x8xf32> -> vector<8x8xf32>
    %cst_33 = arith.constant 0.353553385 : f32
    %59 = vector.broadcast %cst_33 : f32 to vector<8x8xf32>
    %60 = arith.mulf %58, %59 : vector<8x8xf32>
    %cst_34 = arith.constant dense<0xFF800000> : vector<8xf32>
    %61 = vector.multi_reduction <maximumf>, %60, %cst_34 [1] : vector<8x8xf32> to vector<8xf32>
    %62 = vector.shape_cast %61 : vector<8xf32> to vector<8x1xf32>
    %63 = vector.broadcast %62 : vector<8x1xf32> to vector<8x8xf32>
    %64 = arith.subf %60, %63 : vector<8x8xf32>
    %65 = math.exp %64 : vector<8x8xf32>
    %cst_35 = arith.constant dense<0.000000e+00> : vector<8xf32>
    %66 = vector.multi_reduction <add>, %65, %cst_35 [1] : vector<8x8xf32> to vector<8xf32>
    %67 = vector.shape_cast %66 : vector<8xf32> to vector<8x1xf32>
    %68 = tpu.reciprocal %67 {approx = true} : vector<8x1xf32> -> vector<8x1xf32>
    %69 = vector.broadcast %68 : vector<8x1xf32> to vector<8x8xf32>
    %70 = arith.mulf %65, %69 : vector<8x8xf32>
    %cst_36 = arith.constant dense<0.000000e+00> : vector<8x8xf32>
    %71 = tpu.matmul %70, %57, %cst_36 {dimension_numbers = #tpu.dot_dimension_numbers<[1], [0], [0], [1], [0, 0, 1, 1], [], []>} : vector<8x8xf32>, vector<8x8xf32>, vector<8x8xf32> -> vector<8x8xf32>
    %72 = vector.extract_strided_slice %6 {offsets = [0, 24], sizes = [8, 8], strides = [1, 1]} : vector<8x32xf32> to vector<8x8xf32>
    %73 = vector.extract_strided_slice %13 {offsets = [0, 24], sizes = [8, 8], strides = [1, 1]} : vector<8x32xf32> to vector<8x8xf32>
    %74 = vector.extract_strided_slice %20 {offsets = [0, 24], sizes = [8, 8], strides = [1, 1]} : vector<8x32xf32> to vector<8x8xf32>
    %cst_37 = arith.constant dense<0.000000e+00> : vector<8x8xf32>
    %75 = tpu.matmul %72, %73, %cst_37 {dimension_numbers = #tpu.dot_dimension_numbers<[1], [1], [0], [0], [0, 0, 1, 0], [], []>} : vector<8x8xf32>, vector<8x8xf32>, vector<8x8xf32> -> vector<8x8xf32>
    %cst_38 = arith.constant 0.353553385 : f32
    %76 = vector.broadcast %cst_38 : f32 to vector<8x8xf32>
    %77 = arith.mulf %75, %76 : vector<8x8xf32>
    %cst_39 = arith.constant dense<0xFF800000> : vector<8xf32>
    %78 = vector.multi_reduction <maximumf>, %77, %cst_39 [1] : vector<8x8xf32> to vector<8xf32>
    %79 = vector.shape_cast %78 : vector<8xf32> to vector<8x1xf32>
    %80 = vector.broadcast %79 : vector<8x1xf32> to vector<8x8xf32>
    %81 = arith.subf %77, %80 : vector<8x8xf32>
    %82 = math.exp %81 : vector<8x8xf32>
    %cst_40 = arith.constant dense<0.000000e+00> : vector<8xf32>
    %83 = vector.multi_reduction <add>, %82, %cst_40 [1] : vector<8x8xf32> to vector<8xf32>
    %84 = vector.shape_cast %83 : vector<8xf32> to vector<8x1xf32>
    %85 = tpu.reciprocal %84 {approx = true} : vector<8x1xf32> -> vector<8x1xf32>
    %86 = vector.broadcast %85 : vector<8x1xf32> to vector<8x8xf32>
    %87 = arith.mulf %82, %86 : vector<8x8xf32>
    %cst_41 = arith.constant dense<0.000000e+00> : vector<8x8xf32>
    %88 = tpu.matmul %87, %74, %cst_41 {dimension_numbers = #tpu.dot_dimension_numbers<[1], [0], [0], [1], [0, 0, 1, 1], [], []>} : vector<8x8xf32>, vector<8x8xf32>, vector<8x8xf32> -> vector<8x8xf32>
    %89 = tpu.concatenate %37, %54, %71, %88 in 1 : vector<8x8xf32>, vector<8x8xf32>, vector<8x8xf32>, vector<8x8xf32> -> vector<8x32xf32>
    %cst_42 = arith.constant 0.000000e+00 : f32
    %90 = vector.broadcast %cst_42 : f32 to vector<8x32xf32>
    %91 = arith.maximumf %89, %90 : vector<8x32xf32>
    %c0_43 = arith.constant 0 : index
    %c0_44 = arith.constant 0 : index
    %92 = vector.load %arg11[%c0_43, %c0_44] : memref<32x128xf32, #tpu.memory_space<vmem>>, vector<32x128xf32>
    %cst_45 = arith.constant dense<0.000000e+00> : vector<8x128xf32>
    %93 = tpu.matmul %91, %92, %cst_45 {dimension_numbers = #tpu.dot_dimension_numbers<[1], [0], [0], [1], [0, 0, 1, 1], [], []>} : vector<8x32xf32>, vector<32x128xf32>, vector<8x128xf32> -> vector<8x128xf32>
    %c0_46 = arith.constant 0 : index
    %c0_47 = arith.constant 0 : index
    %94 = vector.load %arg12[%c0_46, %c0_47] : memref<1x128xf32, #tpu.memory_space<vmem>>, vector<1x128xf32>
    %95 = vector.broadcast %94 : vector<1x128xf32> to vector<8x128xf32>
    %96 = arith.addf %93, %95 : vector<8x128xf32>
    %c0_48 = arith.constant 0 : index
    %c0_49 = arith.constant 0 : index
    %c0_50 = arith.constant 0 : index
    %97 = vector.load %arg13[%c0_48, %c0_49, %c0_50] : memref<1x8x128xf32, #tpu.memory_space<vmem>>, vector<1x8x128xf32>
    %98 = vector.shape_cast %97 : vector<1x8x128xf32> to vector<8x128xf32>
    %99 = vector.shape_cast %96 : vector<8x128xf32> to vector<1x8x128xf32>
    tpu.vector_store %arg13[%c0_48, %c0_49, %c0_50], %99 {strides = array<i32>} : memref<1x8x128xf32, #tpu.memory_space<vmem>>, vector<1x8x128xf32>,
    return
  }
  func.func @transform_0(%arg0: i32, %arg1: i32) -> (i32, i32, i32) {
    %c0_i32 = arith.constant 0 : i32
    %c0_i32_0 = arith.constant 0 : i32
    return %arg0, %arg1, %c0_i32 : i32, i32, i32
  }
  func.func @transform_1(%arg0: i32, %arg1: i32) -> (i32, i32, i32) {
    %c0_i32 = arith.constant 0 : i32
    %c0_i32_0 = arith.constant 0 : i32
    %c0_i32_1 = arith.constant 0 : i32
    return %arg0, %c0_i32, %c0_i32_0 : i32, i32, i32
  }
  func.func @transform_2(%arg0: i32, %arg1: i32) -> (i32, i32, i32) {
    %c0_i32 = arith.constant 0 : i32
    %c0_i32_0 = arith.constant 0 : i32
    %c0_i32_1 = arith.constant 0 : i32
    return %arg0, %c0_i32, %c0_i32_0 : i32, i32, i32
  }
  func.func @transform_3(%arg0: i32, %arg1: i32) -> (i32, i32) {
    %c0_i32 = arith.constant 0 : i32
    %c0_i32_0 = arith.constant 0 : i32
    %c0_i32_1 = arith.constant 0 : i32
    return %c0_i32, %c0_i32_0 : i32, i32
  }
  func.func @transform_4(%arg0: i32, %arg1: i32) -> (i32, i32) {
    %c0_i32 = arith.constant 0 : i32
    %c0_i32_0 = arith.constant 0 : i32
    %c0_i32_1 = arith.constant 0 : i32
    return %c0_i32, %c0_i32_0 : i32, i32
  }
  func.func @transform_5(%arg0: i32, %arg1: i32) -> (i32, i32) {
    %c0_i32 = arith.constant 0 : i32
    %c0_i32_0 = arith.constant 0 : i32
    %c0_i32_1 = arith.constant 0 : i32
    return %c0_i32, %c0_i32_0 : i32, i32
  }
  func.func @transform_6(%arg0: i32, %arg1: i32) -> (i32, i32) {
    %c0_i32 = arith.constant 0 : i32
    %c0_i32_0 = arith.constant 0 : i32
    %c0_i32_1 = arith.constant 0 : i32
    return %c0_i32, %c0_i32_0 : i32, i32
  }
  func.func @transform_7(%arg0: i32, %arg1: i32) -> (i32, i32) {
    %c0_i32 = arith.constant 0 : i32
    %c0_i32_0 = arith.constant 0 : i32
    %c0_i32_1 = arith.constant 0 : i32
    return %c0_i32, %c0_i32_0 : i32, i32
  }
  func.func @transform_8(%arg0: i32, %arg1: i32) -> (i32, i32) {
    %c0_i32 = arith.constant 0 : i32
    %c0_i32_0 = arith.constant 0 : i32
    %c0_i32_1 = arith.constant 0 : i32
    return %c0_i32, %c0_i32_0 : i32, i32
  }
  func.func @transform_9(%arg0: i32, %arg1: i32) -> (i32, i32) {
    %c0_i32 = arith.constant 0 : i32
    %c0_i32_0 = arith.constant 0 : i32
    %c0_i32_1 = arith.constant 0 : i32
    return %c0_i32, %c0_i32_0 : i32, i32
  }
  func.func @transform_10(%arg0: i32, %arg1: i32) -> (i32, i32) {
    %c0_i32 = arith.constant 0 : i32
    %c0_i32_0 = arith.constant 0 : i32
    %c0_i32_1 = arith.constant 0 : i32
    return %c0_i32, %c0_i32_0 : i32, i32
  }
  func.func @transform_11(%arg0: i32, %arg1: i32) -> (i32, i32, i32) {
    %c0_i32 = arith.constant 0 : i32
    %c0_i32_0 = arith.constant 0 : i32
    return %arg0, %arg1, %c0_i32 : i32, i32, i32
  }
}

</mosaic_0001>

<llo_original>
// kernel: tpu_custom_call.1
$region0: #{tpu_custom_call.1}
  #allocation0 [shape = 'u32[]', space=smem, size = 0x4, offset = 0x4, fixed_abs, tag = 'smem constant byte address 0x4 - core index']
  #allocation1 [shape = 'u32[144,128]{1,0:T(1,128)}', space=vmem, size = 0x12000, scoped, tag = 'internal scratch']
  %s0 = inlined_call_operand.hbm [shape: f32[2,8,32], index: 0, kind: input, shape index: {}]
  %s1 = inlined_call_operand.hbm [shape: f32[2,8,32], index: 1, kind: input, shape index: {}]
  %s2 = inlined_call_operand.hbm [shape: f32[2,8,16], index: 2, kind: input, shape index: {}]
  %s3 = inlined_call_operand.hbm [shape: f32[32,32], index: 3, kind: input, shape index: {}]
  %s4 = inlined_call_operand.vmem [shape: f32[1,32], index: 4, kind: input, shape index: {}]
  %s5 = inlined_call_operand.hbm [shape: f32[16,32], index: 5, kind: input, shape index: {}]
  %s6 = inlined_call_operand.vmem [shape: f32[1,32], index: 6, kind: input, shape index: {}]
  %s7 = inlined_call_operand.hbm [shape: f32[32,32], index: 7, kind: input, shape index: {}]
  %s8 = inlined_call_operand.vmem [shape: f32[1,32], index: 8, kind: input, shape index: {}]
  %s9 = inlined_call_operand.hbm [shape: f32[32,128], index: 9, kind: input, shape index: {}]
  %s10 = inlined_call_operand.vmem [shape: f32[1,128], index: 10, kind: input, shape index: {}]
  %s11 = inlined_call_operand.hbm [shape: f32[2,8,128], index: 11, kind: output, shape index: {}]
  %s12 = sld [smem:[#allocation0]]
  $region105: #{tpu_custom_call.1} parent=0
    _
  %s14 = ssub.s32 1, %s12
  %s15 = scalar_select 0, %s14, %s12
  $region1: #{tpu_custom_call.1} parent=0
    #allocation2 [shape = 'u8[8192]{0}', space=vmem, size = 0x2000, scoped, tag = 'input window, operand 0']
    #allocation3 [shape = 's32[2]{0}', space=sflag, size = 0x8, scoped, tag = 'scoped memory for tpu_custom_call.1']
    #allocation4 [shape = 's32[2]{0}', space=sflag, size = 0x8, scoped, tag = 'scoped memory for tpu_custom_call.1']
    #allocation5 [shape = 'u8[8192]{0}', space=vmem, size = 0x2000, scoped, tag = 'input window, operand 1']
    #allocation6 [shape = 's32[2]{0}', space=sflag, size = 0x8, scoped, tag = 'scoped memory for tpu_custom_call.1']
    #allocation7 [shape = 'u8[8192]{0}', space=vmem, size = 0x2000, scoped, tag = 'input window, operand 2']
    #allocation8 [shape = 'u8[16384]{0}', space=vmem, size = 0x4000, scoped, tag = 'input window, operand 3, single buffered']
    #allocation9 [shape = 's32[1]{0}', space=sflag, size = 0x4, scoped, tag = 'scoped memory for tpu_custom_call.1']
    #allocation10 [shape = 'u8[8192]{0}', space=vmem, size = 0x2000, scoped, tag = 'input window, operand 5, single buffered']
    #allocation11 [shape = 'u8[16384]{0}', space=vmem, size = 0x4000, scoped, tag = 'input window, operand 7, single buffered']
    #allocation12 [shape = 's32[1]{0}', space=sflag, size = 0x4, scoped, tag = 'scoped memory for tpu_custom_call.1']
    #allocation13 [shape = 'u8[16384]{0}', space=vmem, size = 0x4000, scoped, tag = 'input window, operand 9, single buffered']
    #allocation14 [shape = 'u8[8192]{0}', space=vmem, size = 0x2000, scoped, tag = 'output window, operand 0']
    %16 = vsyncpa [#allocation3], 0
    %s17 = scalar_lea.sflag [#allocation3], 1
    %18 = vsyncpa %s17, 0
    %19 = vsyncpa [#allocation6], 0
    %s20 = scalar_lea.sflag [#allocation6], 1
    %21 = vsyncpa %s20, 0
    %22 = vsyncpa [#allocation9], 0
    %23 = vsyncpa [#allocation12], 0
    %24 = vsyncpa [#allocation4], 0
    %s25 = scalar_lea.sflag [#allocation4], 1
    %26 = vsyncpa %s25, 0
    loop: start=0, step=1, limit=4
    $region2: #{tpu_custom_call.1} parent=1 // loop_pre_header
      _
    $region3: #{tpu_custom_call.1} parent=1 // loop_header
      %s28 = sphi 0, %s32
      %p29 = scmp.ge.s32.totalorder %s28, 4
      %s35 = sphi 0, %s47
      %s36 = sphi 0, %s43
      %s37 = sphi 0, %s35
      %s38 = sphi 0, %s36
      %s39 = sphi 0, %s37
      %s40 = sphi 0, %s38
      %s52 = sphi 0, %s54
      %s55 = sphi 0, %s52
      %s56 = sphi 0, %s55
      %s72 = sphi 0, %s56
      %s78 = sphi 0, %s80
      %s81 = sphi 0, %s78
      %s82 = sphi 0, %s81
      %s98 = sphi 0, %s82
      %s104 = sphi 0, %s106
      %s107 = sphi 0, %s104
      %s108 = sphi 0, %s107
      %s124 = sphi 0, %s108
      %s128 = sphi 0, %s128
      %s130 = sphi 0, %s128
      %s131 = sphi 0, %s130
      %s145 = sphi 0, %s131
      %s149 = sphi 0, %s149
      %s151 = sphi 0, %s149
      %s152 = sphi 0, %s151
      %s166 = sphi 0, %s152
      %s170 = sphi 0, %s170
      %s172 = sphi 0, %s170
      %s173 = sphi 0, %s172
      %s187 = sphi 0, %s173
      %s191 = sphi 0, %s191
      %s193 = sphi 0, %s191
      %s194 = sphi 0, %s193
      %s208 = sphi 0, %s194
      %s212 = sphi 0, %s212
      %s214 = sphi 0, %s212
      %s215 = sphi 0, %s214
      %s229 = sphi 0, %s215
      %s233 = sphi 0, %s233
      %s235 = sphi 0, %s233
      %s236 = sphi 0, %s235
      %s250 = sphi 0, %s236
      %s254 = sphi 0, %s254
      %s256 = sphi 0, %s254
      %s257 = sphi 0, %s256
      %s271 = sphi 0, %s257
      %s275 = sphi 0, %s275
      %s277 = sphi 0, %s275
      %s278 = sphi 0, %s277
      %s292 = sphi 0, %s278
      %s300 = sphi 0, %s302
      %s303 = sphi 0, %s300
      %s304 = sphi 0, %s303
      %s320 = sphi 0, %s304
    $region4: #{tpu_custom_call.1} parent=1 // loop_header_branch
      %31 = sbr.rel (%p29) target = $region8
    $region5: #{tpu_custom_call.1} parent=1 // loop_body
      %s33 = ssub.s32 %s28, 1
      %s34 = ssub.s32 %s28, 2
      %s41 = sadd.s32 1, %s36
      %p42 = scmp.ge.s32.totalorder %s41, 1
      %s43 = scalar_select %p42, 0, %s41
      %s44 = sadd.s32 1, %s35
      %s45 = scalar_select %p42, %s44, %s35
      %p46 = scmp.ge.s32.totalorder %s45, 2
      %s47 = scalar_select %p46, 0, %s45
      %s48 = ssub.s32 %s35, %s47
      %s49 = ssub.s32 %s36, %s43
      %s50 = sor.u32 %s48, %s49
      %p51 = scmp.eq.s32.totalorder %s50, 0
      %s53 = sadd.s32 %s52, 1
      %s54 = scalar_select %p51, %s52, %s53
      %p57 = pneg %p51
      %p58 = scmp.eq.s32.totalorder %s28, 1
      %p59 = por %p57, %p58
      %p60 = scmp.ne.s32.totalorder %s52, %s55
      %p61 = scmp.eq.s32.totalorder %s28, 0
      %p62 = por %p60, %p61
      %p63 = scmp.ne.s32.totalorder %s52, %s55
      %p64 = scmp.eq.s32.totalorder %s33, 1
      %p65 = por %p63, %p64
      %p66 = scmp.ne.s32.totalorder %s55, %s56
      %p67 = scmp.eq.s32.totalorder %s33, 0
      %p68 = por %p66, %p67
      %p69 = scmp.ne.s32.totalorder %s55, %s56
      %p70 = scmp.eq.s32.totalorder %s34, 1
      %p71 = por %p69, %p70
      %p73 = scmp.ne.s32.totalorder %s56, %s72
      %p74 = scmp.eq.s32.totalorder %s34, 0
      %p75 = por %p73, %p74
      %s76 = ssub.s32 %s35, %s47
      %p77 = scmp.eq.s32.totalorder %s76, 0
      %s79 = sadd.s32 %s78, 1
      %s80 = scalar_select %p77, %s78, %s79
      %p83 = pneg %p77
      %p84 = scmp.eq.s32.totalorder %s28, 1
      %p85 = por %p83, %p84
      %p86 = scmp.ne.s32.totalorder %s78, %s81
      %p87 = scmp.eq.s32.totalorder %s28, 0
      %p88 = por %p86, %p87
      %p89 = scmp.ne.s32.totalorder %s78, %s81
      %p90 = scmp.eq.s32.totalorder %s33, 1
      %p91 = por %p89, %p90
      %p92 = scmp.ne.s32.totalorder %s81, %s82
      %p93 = scmp.eq.s32.totalorder %s33, 0
      %p94 = por %p92, %p93
      %p95 = scmp.ne.s32.totalorder %s81, %s82
      %p96 = scmp.eq.s32.totalorder %s34, 1
      %p97 = por %p95, %p96
      %p99 = scmp.ne.s32.totalorder %s82, %s98
      %p100 = scmp.eq.s32.totalorder %s34, 0
      %p101 = por %p99, %p100
      %s102 = ssub.s32 %s35, %s47
      %p103 = scmp.eq.s32.totalorder %s102, 0
      %s105 = sadd.s32 %s104, 1
      %s106 = scalar_select %p103, %s104, %s105
      %p109 = pneg %p103
      %p110 = scmp.eq.s32.totalorder %s28, 1
      %p111 = por %p109, %p110
      %p112 = scmp.ne.s32.totalorder %s104, %s107
      %p113 = scmp.eq.s32.totalorder %s28, 0
      %p114 = por %p112, %p113
      %p115 = scmp.ne.s32.totalorder %s104, %s107
      %p116 = scmp.eq.s32.totalorder %s33, 1
      %p117 = por %p115, %p116
      %p118 = scmp.ne.s32.totalorder %s107, %s108
      %p119 = scmp.eq.s32.totalorder %s33, 0
      %p120 = por %p118, %p119
      %p121 = scmp.ne.s32.totalorder %s107, %s108
      %p122 = scmp.eq.s32.totalorder %s34, 1
      %p123 = por %p121, %p122
      %p125 = scmp.ne.s32.totalorder %s108, %s124
      %p126 = scmp.eq.s32.totalorder %s34, 0
      %p127 = por %p125, %p126
      %s129 = sadd.s32 %s128, 1
      %p132 = scmp.eq.s32.totalorder %s28, 1
      %p133 = scmp.ne.s32.totalorder %s128, %s130
      %p134 = scmp.eq.s32.totalorder %s28, 0
      %p135 = por %p133, %p134
      %p136 = scmp.ne.s32.totalorder %s128, %s130
      %p137 = scmp.eq.s32.totalorder %s33, 1
      %p138 = por %p136, %p137
      %p139 = scmp.ne.s32.totalorder %s130, %s131
      %p140 = scmp.eq.s32.totalorder %s33, 0
      %p141 = por %p139, %p140
      %p142 = scmp.ne.s32.totalorder %s130, %s131
      %p143 = scmp.eq.s32.totalorder %s34, 1
      %p144 = por %p142, %p143
      %p146 = scmp.ne.s32.totalorder %s131, %s145
      %p147 = scmp.eq.s32.totalorder %s34, 0
      %p148 = por %p146, %p147
      %s150 = sadd.s32 %s149, 1
      %p153 = scmp.eq.s32.totalorder %s28, 1
      %p154 = scmp.ne.s32.totalorder %s149, %s151
      %p155 = scmp.eq.s32.totalorder %s28, 0
      %p156 = por %p154, %p155
      %p157 = scmp.ne.s32.totalorder %s149, %s151
      %p158 = scmp.eq.s32.totalorder %s33, 1
      %p159 = por %p157, %p158
      %p160 = scmp.ne.s32.totalorder %s151, %s152
      %p161 = scmp.eq.s32.totalorder %s33, 0
      %p162 = por %p160, %p161
      %p163 = scmp.ne.s32.totalorder %s151, %s152
      %p164 = scmp.eq.s32.totalorder %s34, 1
      %p165 = por %p163, %p164
      %p167 = scmp.ne.s32.totalorder %s152, %s166
      %p168 = scmp.eq.s32.totalorder %s34, 0
      %p169 = por %p167, %p168
      %s171 = sadd.s32 %s170, 1
      %p174 = scmp.eq.s32.totalorder %s28, 1
      %p175 = scmp.ne.s32.totalorder %s170, %s172
      %p176 = scmp.eq.s32.totalorder %s28, 0
      %p177 = por %p175, %p176
      %p178 = scmp.ne.s32.totalorder %s170, %s172
      %p179 = scmp.eq.s32.totalorder %s33, 1
      %p180 = por %p178, %p179
      %p181 = scmp.ne.s32.totalorder %s172, %s173
      %p182 = scmp.eq.s32.totalorder %s33, 0
      %p183 = por %p181, %p182
      %p184 = scmp.ne.s32.totalorder %s172, %s173
      %p185 = scmp.eq.s32.totalorder %s34, 1
      %p186 = por %p184, %p185
      %p188 = scmp.ne.s32.totalorder %s173, %s187
      %p189 = scmp.eq.s32.totalorder %s34, 0
      %p190 = por %p188, %p189
      %s192 = sadd.s32 %s191, 1
      %p195 = scmp.eq.s32.totalorder %s28, 1
      %p196 = scmp.ne.s32.totalorder %s191, %s193
      %p197 = scmp.eq.s32.totalorder %s28, 0
      %p198 = por %p196, %p197
      %p199 = scmp.ne.s32.totalorder %s191, %s193
      %p200 = scmp.eq.s32.totalorder %s33, 1
      %p201 = por %p199, %p200
      %p202 = scmp.ne.s32.totalorder %s193, %s194
      %p203 = scmp.eq.s32.totalorder %s33, 0
      %p204 = por %p202, %p203
      %p205 = scmp.ne.s32.totalorder %s193, %s194
      %p206 = scmp.eq.s32.totalorder %s34, 1
      %p207 = por %p205, %p206
      %p209 = scmp.ne.s32.totalorder %s194, %s208
      %p210 = scmp.eq.s32.totalorder %s34, 0
      %p211 = por %p209, %p210
      %s213 = sadd.s32 %s212, 1
      %p216 = scmp.eq.s32.totalorder %s28, 1
      %p217 = scmp.ne.s32.totalorder %s212, %s214
      %p218 = scmp.eq.s32.totalorder %s28, 0
      %p219 = por %p217, %p218
      %p220 = scmp.ne.s32.totalorder %s212, %s214
      %p221 = scmp.eq.s32.totalorder %s33, 1
      %p222 = por %p220, %p221
      %p223 = scmp.ne.s32.totalorder %s214, %s215
      %p224 = scmp.eq.s32.totalorder %s33, 0
      %p225 = por %p223, %p224
      %p226 = scmp.ne.s32.totalorder %s214, %s215
      %p227 = scmp.eq.s32.totalorder %s34, 1
      %p228 = por %p226, %p227
      %p230 = scmp.ne.s32.totalorder %s215, %s229
      %p231 = scmp.eq.s32.totalorder %s34, 0
      %p232 = por %p230, %p231
      %s234 = sadd.s32 %s233, 1
      %p237 = scmp.eq.s32.totalorder %s28, 1
      %p238 = scmp.ne.s32.totalorder %s233, %s235
      %p239 = scmp.eq.s32.totalorder %s28, 0
      %p240 = por %p238, %p239
      %p241 = scmp.ne.s32.totalorder %s233, %s235
      %p242 = scmp.eq.s32.totalorder %s33, 1
      %p243 = por %p241, %p242
      %p244 = scmp.ne.s32.totalorder %s235, %s236
      %p245 = scmp.eq.s32.totalorder %s33, 0
      %p246 = por %p244, %p245
      %p247 = scmp.ne.s32.totalorder %s235, %s236
      %p248 = scmp.eq.s32.totalorder %s34, 1
      %p249 = por %p247, %p248
      %p251 = scmp.ne.s32.totalorder %s236, %s250
      %p252 = scmp.eq.s32.totalorder %s34, 0
      %p253 = por %p251, %p252
      %s255 = sadd.s32 %s254, 1
      %p258 = scmp.eq.s32.totalorder %s28, 1
      %p259 = scmp.ne.s32.totalorder %s254, %s256
      %p260 = scmp.eq.s32.totalorder %s28, 0
      %p261 = por %p259, %p260
      %p262 = scmp.ne.s32.totalorder %s254, %s256
      %p263 = scmp.eq.s32.totalorder %s33, 1
      %p264 = por %p262, %p263
      %p265 = scmp.ne.s32.totalorder %s256, %s257
      %p266 = scmp.eq.s32.totalorder %s33, 0
      %p267 = por %p265, %p266
      %p268 = scmp.ne.s32.totalorder %s256, %s257
      %p269 = scmp.eq.s32.totalorder %s34, 1
      %p270 = por %p268, %p269
      %p272 = scmp.ne.s32.totalorder %s257, %s271
      %p273 = scmp.eq.s32.totalorder %s34, 0
      %p274 = por %p272, %p273
      %s276 = sadd.s32 %s275, 1
      %p279 = scmp.eq.s32.totalorder %s28, 1
      %p280 = scmp.ne.s32.totalorder %s275, %s277
      %p281 = scmp.eq.s32.totalorder %s28, 0
      %p282 = por %p280, %p281
      %p283 = scmp.ne.s32.totalorder %s275, %s277
      %p284 = scmp.eq.s32.totalorder %s33, 1
      %p285 = por %p283, %p284
      %p286 = scmp.ne.s32.totalorder %s277, %s278
      %p287 = scmp.eq.s32.totalorder %s33, 0
      %p288 = por %p286, %p287
      %p289 = scmp.ne.s32.totalorder %s277, %s278
      %p290 = scmp.eq.s32.totalorder %s34, 1
      %p291 = por %p289, %p290
      %p293 = scmp.ne.s32.totalorder %s278, %s292
      %p294 = scmp.eq.s32.totalorder %s34, 0
      %p295 = por %p293, %p294
      %s296 = ssub.s32 %s35, %s47
      %s297 = ssub.s32 %s36, %s43
      %s298 = sor.u32 %s296, %s297
      %p299 = scmp.eq.s32.totalorder %s298, 0
      %s301 = sadd.s32 %s300, 1
      %s302 = scalar_select %p299, %s300, %s301
      %p305 = pneg %p299
      %p306 = scmp.eq.s32.totalorder %s28, 1
      %p307 = por %p305, %p306
      %p308 = scmp.ne.s32.totalorder %s300, %s303
      %p309 = scmp.eq.s32.totalorder %s28, 0
      %p310 = por %p308, %p309
      %p311 = scmp.ne.s32.totalorder %s300, %s303
      %p312 = scmp.eq.s32.totalorder %s33, 1
      %p313 = por %p311, %p312
      %p314 = scmp.ne.s32.totalorder %s303, %s304
      %p315 = scmp.eq.s32.totalorder %s33, 0
      %p316 = por %p314, %p315
      %p317 = scmp.ne.s32.totalorder %s303, %s304
      %p318 = scmp.eq.s32.totalorder %s34, 1
      %p319 = por %p317, %p318
      %p321 = scmp.ne.s32.totalorder %s304, %s320
      %p322 = scmp.eq.s32.totalorder %s34, 0
      %p323 = por %p321, %p322
      %p324 = scmp.le.s32.totalorder 1, %s28
      %p325 = scmp.lt.s32.totalorder %s28, 3
      %p326 = pnand %p324, %p325
      %p327 = pneg %p326
      // Predicated region
      $region9: #{tpu_custom_call.1} parent=5 // pred_check
        _
      $region10: #{tpu_custom_call.1} parent=5 // pred_check_branch
        %329 = sbr.rel (%p326) target = $region12
      $region11: #{tpu_custom_call.1} parent=5 // pred_region
        %s330 = ssub.s32 %s28, 1
        // Predicated region
        $region13: #{tpu_custom_call.1} parent=11 // pred_check
          %p331 = pneg %p141
        $region14: #{tpu_custom_call.1} parent=11 // pred_check_branch
          %333 = sbr.rel (%p331) target = $region16
        $region15: #{tpu_custom_call.1} parent=11 // pred_region
          %s335 = ssub.s32 512, 512
          %336 = vsyncadd [#allocation9], %s335
          %s337 = sshll.u32 [#allocation8], 4
          %s338 = int_to_ptr.vmem [resolvable:$true] %s337
          %343 = dma.hbm_to_vmem [thread:$0]  %s3, 512, %s338, [#allocation9], 128, 128, 8
        $region16: #{tpu_custom_call.1} parent=11 // pred_fallthru
          _
        // Predicated region
        $region17: #{tpu_custom_call.1} parent=11 // pred_check
          %p344 = pneg %p162
        $region18: #{tpu_custom_call.1} parent=11 // pred_check_branch
          %346 = sbr.rel (%p344) target = $region20
        $region19: #{tpu_custom_call.1} parent=11 // pred_region
          _
        $region20: #{tpu_custom_call.1} parent=11 // pred_fallthru
          _
        // Predicated region
        $region21: #{tpu_custom_call.1} parent=11 // pred_check
          %p347 = pneg %p183
        $region22: #{tpu_custom_call.1} parent=11 // pred_check_branch
          %349 = sbr.rel (%p347) target = $region24
        $region23: #{tpu_custom_call.1} parent=11 // pred_region
          %s351 = ssub.s32 256, 256
          %352 = vsyncadd [#allocation9], %s351
          %s353 = sshll.u32 [#allocation10], 4
          %s354 = int_to_ptr.vmem [resolvable:$true] %s353
          %359 = dma.hbm_to_vmem [thread:$0]  %s5, 256, %s354, [#allocation9], 128, 128, 8
        $region24: #{tpu_custom_call.1} parent=11 // pred_fallthru
          _
        // Predicated region
        $region25: #{tpu_custom_call.1} parent=11 // pred_check
          %p360 = pneg %p204
        $region26: #{tpu_custom_call.1} parent=11 // pred_check_branch
          %362 = sbr.rel (%p360) target = $region28
        $region27: #{tpu_custom_call.1} parent=11 // pred_region
          _
        $region28: #{tpu_custom_call.1} parent=11 // pred_fallthru
          _
        // Predicated region
        $region29: #{tpu_custom_call.1} parent=11 // pred_check
          %p363 = pneg %p225
        $region30: #{tpu_custom_call.1} parent=11 // pred_check_branch
          %365 = sbr.rel (%p363) target = $region32
        $region31: #{tpu_custom_call.1} parent=11 // pred_region
          %s367 = ssub.s32 512, 512
          %368 = vsyncadd [#allocation12], %s367
          %s369 = sshll.u32 [#allocation11], 4
          %s370 = int_to_ptr.vmem [resolvable:$true] %s369
          %375 = dma.hbm_to_vmem [thread:$0]  %s7, 512, %s370, [#allocation12], 128, 128, 8
        $region32: #{tpu_custom_call.1} parent=11 // pred_fallthru
          _
        // Predicated region
        $region33: #{tpu_custom_call.1} parent=11 // pred_check
          %p376 = pneg %p246
        $region34: #{tpu_custom_call.1} parent=11 // pred_check_branch
          %378 = sbr.rel (%p376) target = $region36
        $region35: #{tpu_custom_call.1} parent=11 // pred_region
          _
        $region36: #{tpu_custom_call.1} parent=11 // pred_fallthru
          _
        // Predicated region
        $region37: #{tpu_custom_call.1} parent=11 // pred_check
          %p379 = pneg %p267
        $region38: #{tpu_custom_call.1} parent=11 // pred_check_branch
          %381 = sbr.rel (%p379) target = $region40
        $region39: #{tpu_custom_call.1} parent=11 // pred_region
          %s383 = ssub.s32 512, 512
          %384 = vsyncadd [#allocation12], %s383
          %s385 = sshll.u32 [#allocation13], 4
          %s386 = int_to_ptr.vmem [resolvable:$true] %s385
          %391 = dma.hbm_to_vmem [thread:$0]  %s9, 512, %s386, [#allocation12], 128, 128, 8
        $region40: #{tpu_custom_call.1} parent=11 // pred_fallthru
          _
        // Predicated region
        $region41: #{tpu_custom_call.1} parent=11 // pred_check
          %p392 = pneg %p288
        $region42: #{tpu_custom_call.1} parent=11 // pred_check_branch
          %394 = sbr.rel (%p392) target = $region44
        $region43: #{tpu_custom_call.1} parent=11 // pred_region
          _
        $region44: #{tpu_custom_call.1} parent=11 // pred_fallthru
          _
      $region12: #{tpu_custom_call.1} parent=5 // pred_fallthru
        _
      %p395 = scmp.lt.s32.totalorder %s28, 2
      // Predicated region
      $region45: #{tpu_custom_call.1} parent=5 // pred_check
        %p396 = pneg %p395
      $region46: #{tpu_custom_call.1} parent=5 // pred_check_branch
        %398 = sbr.rel (%p396) target = $region48
      $region47: #{tpu_custom_call.1} parent=5 // pred_region
        // Predicated region
        $region49: #{tpu_custom_call.1} parent=47 // pred_check
          %p399 = pneg %p62
        $region50: #{tpu_custom_call.1} parent=47 // pred_check_branch
          %401 = sbr.rel (%p399) target = $region52
        $region51: #{tpu_custom_call.1} parent=47 // pred_region
          %s402 = sand.u32 %s52, 1
          %s403 = scalar_lea.sflag [#allocation3], %s402
          %s404 = sand.u32 %s52, 1
          %s405 = smul.addr %s404, 8
          %s406 = scalar_lea.vmem [#allocation2], %s405
          %s408 = ssub.s32 128, 128
          %409 = vsyncadd %s403, %s408
          %s410 = sadd.s32 %s36, %s35
          %s411 = smul.addr %s410, 128
          %s412 = scalar_lea.hbm %s0, %s411
          %s414 = sshll.u32 %s406, 4
          %s415 = int_to_ptr.vmem [resolvable:$true] %s414
          %417 = dma.hbm_to_vmem [thread:$0]  %s412, 128, %s415, %s403
        $region52: #{tpu_custom_call.1} parent=47 // pred_fallthru
          _
        // Predicated region
        $region53: #{tpu_custom_call.1} parent=47 // pred_check
          %p418 = pneg %p88
        $region54: #{tpu_custom_call.1} parent=47 // pred_check_branch
          %420 = sbr.rel (%p418) target = $region56
        $region55: #{tpu_custom_call.1} parent=47 // pred_region
          %s421 = sand.u32 %s28, 1
          %s422 = scalar_lea.sflag [#allocation6], %s421
          %s423 = sand.u32 %s78, 1
          %s424 = smul.addr %s423, 8
          %s425 = scalar_lea.vmem [#allocation5], %s424
          %s427 = ssub.s32 128, 128
          %428 = vsyncadd %s422, %s427
          %s429 = smul.addr %s35, 128
          %s430 = scalar_lea.hbm %s1, %s429
          %s432 = sshll.u32 %s425, 4
          %s433 = int_to_ptr.vmem [resolvable:$true] %s432
          %435 = dma.hbm_to_vmem [thread:$0]  %s430, 128, %s433, %s422
        $region56: #{tpu_custom_call.1} parent=47 // pred_fallthru
          _
        // Predicated region
        $region57: #{tpu_custom_call.1} parent=47 // pred_check
          %p436 = pneg %p114
        $region58: #{tpu_custom_call.1} parent=47 // pred_check_branch
          %438 = sbr.rel (%p436) target = $region60
        $region59: #{tpu_custom_call.1} parent=47 // pred_region
          %s439 = sand.u32 %s28, 1
          %s440 = scalar_lea.sflag [#allocation6], %s439
          %s441 = sand.u32 %s104, 1
          %s442 = smul.addr %s441, 8
          %s443 = scalar_lea.vmem [#allocation7], %s442
          %s445 = ssub.s32 128, 128
          %446 = vsyncadd %s440, %s445
          %s447 = smul.addr %s35, 128
          %s448 = scalar_lea.hbm %s2, %s447
          %s450 = sshll.u32 %s443, 4
          %s451 = int_to_ptr.vmem [resolvable:$true] %s450
          %453 = dma.hbm_to_vmem [thread:$0]  %s448, 128, %s451, %s440
        $region60: #{tpu_custom_call.1} parent=47 // pred_fallthru
          _
      $region48: #{tpu_custom_call.1} parent=5 // pred_fallthru
        _
      %p454 = scmp.le.s32.totalorder 1, %s28
      %p455 = scmp.lt.s32.totalorder %s28, 3
      %p456 = pnand %p454, %p455
      %p457 = pneg %p456
      // Predicated region
      $region61: #{tpu_custom_call.1} parent=5 // pred_check
        _
      $region62: #{tpu_custom_call.1} parent=5 // pred_check_branch
        %459 = sbr.rel (%p456) target = $region64
      $region63: #{tpu_custom_call.1} parent=5 // pred_region
        %s460 = ssub.s32 %s28, 1
        %s461 = sand.u32 %s55, 1
        %s462 = scalar_lea.sflag [#allocation3], %s461
        %s463 = sand.u32 %s55, 1
        %s464 = smul.addr %s463, 8
        %s465 = scalar_lea.vmem [#allocation2], %s464
        // Predicated region
        $region65: #{tpu_custom_call.1} parent=63 // pred_check
          %p466 = pneg %p68
        $region66: #{tpu_custom_call.1} parent=63 // pred_check_branch
          %468 = sbr.rel (%p466) target = $region68
        $region67: #{tpu_custom_call.1} parent=63 // pred_region
          %469 = dma.done %s462, 128
        $region68: #{tpu_custom_call.1} parent=63 // pred_fallthru
          _
        %s470 = sand.u32 %s33, 1
        %s471 = scalar_lea.sflag [#allocation6], %s470
        %s472 = sand.u32 %s81, 1
        %s473 = smul.addr %s472, 8
        %s474 = scalar_lea.vmem [#allocation5], %s473
        // Predicated region
        $region69: #{tpu_custom_call.1} parent=63 // pred_check
          %p475 = pneg %p94
        $region70: #{tpu_custom_call.1} parent=63 // pred_check_branch
          %477 = sbr.rel (%p475) target = $region72
        $region71: #{tpu_custom_call.1} parent=63 // pred_region
          %478 = dma.done %s471, 128
        $region72: #{tpu_custom_call.1} parent=63 // pred_fallthru
          _
        %s479 = sand.u32 %s33, 1
        %s480 = scalar_lea.sflag [#allocation6], %s479
        %s481 = sand.u32 %s107, 1
        %s482 = smul.addr %s481, 8
        %s483 = scalar_lea.vmem [#allocation7], %s482
        // Predicated region
        $region73: #{tpu_custom_call.1} parent=63 // pred_check
          %p484 = pneg %p120
        $region74: #{tpu_custom_call.1} parent=63 // pred_check_branch
          %486 = sbr.rel (%p484) target = $region76
        $region75: #{tpu_custom_call.1} parent=63 // pred_region
          %487 = dma.done %s480, 128
        $region76: #{tpu_custom_call.1} parent=63 // pred_fallthru
          _
        // Predicated region
        $region77: #{tpu_custom_call.1} parent=63 // pred_check
          %p488 = pneg %p141
        $region78: #{tpu_custom_call.1} parent=63 // pred_check_branch
          %490 = sbr.rel (%p488) target = $region80
        $region79: #{tpu_custom_call.1} parent=63 // pred_region
          %491 = dma.done [#allocation9], 512
        $region80: #{tpu_custom_call.1} parent=63 // pred_fallthru
          _
        // Predicated region
        $region81: #{tpu_custom_call.1} parent=63 // pred_check
          %p492 = pneg %p183
        $region82: #{tpu_custom_call.1} parent=63 // pred_check_branch
          %494 = sbr.rel (%p492) target = $region84
        $region83: #{tpu_custom_call.1} parent=63 // pred_region
          %495 = dma.done [#allocation9], 256
        $region84: #{tpu_custom_call.1} parent=63 // pred_fallthru
          _
        // Predicated region
        $region85: #{tpu_custom_call.1} parent=63 // pred_check
          %p496 = pneg %p225
        $region86: #{tpu_custom_call.1} parent=63 // pred_check_branch
          %498 = sbr.rel (%p496) target = $region88
        $region87: #{tpu_custom_call.1} parent=63 // pred_region
          %499 = dma.done [#allocation12], 512
        $region88: #{tpu_custom_call.1} parent=63 // pred_fallthru
          _
        // Predicated region
        $region89: #{tpu_custom_call.1} parent=63 // pred_check
          %p500 = pneg %p267
        $region90: #{tpu_custom_call.1} parent=63 // pred_check_branch
          %502 = sbr.rel (%p500) target = $region92
        $region91: #{tpu_custom_call.1} parent=63 // pred_region
          %503 = dma.done [#allocation12], 512
        $region92: #{tpu_custom_call.1} parent=63 // pred_fallthru
          _
        %s504 = sand.u32 %s55, 1
        %s505 = scalar_lea.sflag [#allocation3], %s504
        %s506 = sand.u32 %s55, 1
        %s507 = smul.addr %s506, 8
        %s508 = scalar_lea.vmem [#allocation2], %s507
        %p509 = pneg %p68
        %p510 = pneg %p65
        %s511 = sand.u32 %s33, 1
        %s512 = scalar_lea.sflag [#allocation6], %s511
        %s513 = sand.u32 %s81, 1
        %s514 = smul.addr %s513, 8
        %s515 = scalar_lea.vmem [#allocation5], %s514
        %p516 = pneg %p94
        %p517 = pneg %p91
        %s518 = sand.u32 %s33, 1
        %s519 = scalar_lea.sflag [#allocation6], %s518
        %s520 = sand.u32 %s107, 1
        %s521 = smul.addr %s520, 8
        %s522 = scalar_lea.vmem [#allocation7], %s521
        %p523 = pneg %p120
        %p524 = pneg %p117
        %p525 = pneg %p141
        %p526 = pneg %p138
        %p527 = pneg %p162
        %p528 = pneg %p159
        %p529 = pneg %p183
        %p530 = pneg %p180
        %p531 = pneg %p204
        %p532 = pneg %p201
        %p533 = pneg %p225
        %p534 = pneg %p222
        %p535 = pneg %p246
        %p536 = pneg %p243
        %p537 = pneg %p267
        %p538 = pneg %p264
        %p539 = pneg %p288
        %p540 = pneg %p285
        %p541 = pneg %p316
        %p542 = pneg %p313
        %s543 = sand.u32 %s303, 1
        %s544 = scalar_lea.sflag [#allocation4], %s543
        %s545 = sand.u32 %s303, 1
        %s546 = smul.addr %s545, 8
        %s547 = scalar_lea.vmem [#allocation14], %s546
        %v548 = vld [vmem:[%s465] sm:$0xff]
        %v549 = vld [vmem:[#allocation8] sm:$0xff]
        %v550 = vld [vmem:[#allocation8 + $0x8] sm:$0xff]
        %v551 = vld [vmem:[#allocation8 + $0x10] sm:$0xff]
        %v552 = vld [vmem:[#allocation8 + $0x18] sm:$0xff]
        %v553 = vld [vmem:[%s4] sm:$0x1]
        %v555 = vlaneseq
        %v556 = vshrl.u32 %v555, 7
        %v557 = vsub.s32 0, %v556
        %v558 = vrot.slane %v553, %v557
        %vm560 = vcmask 261120
        %v562 = vsel %vm560, %v548, 0
        %564 = vmatprep.subr.mxu0 0.0
        %565 = vmatpush1.msra.mxu0 0.0
        %566 = vmatprep.subr.mxu0 0.0
        %567 = vmatpush1.msra.mxu0 0.0
        %568 = vmatprep.subr.mxu0 0.0
        %569 = vmatpush1.msra.mxu0 0.0
        %570 = vmatprep.subr.mxu0 0.0
        %571 = vmatpush1.msra.mxu0 0.0
        %572 = vmatprep.subr.mxu0 0.0
        %573 = vmatpush1.msra.mxu0 0.0
        %574 = vmatprep.subr.mxu0 0.0
        %575 = vmatpush1.msra.mxu0 0.0
        %576 = vmatprep.subr.mxu0 0.0
        %577 = vmatpush1.msra.mxu0 0.0
        %578 = vmatprep.subr.mxu0 0.0
        %579 = vmatpush1.msra.mxu0 0.0
        %580 = vmatprep.subr.mxu0 0.0
        %581 = vmatpush1.msra.mxu0 0.0
        %582 = vmatprep.subr.mxu0 0.0
        %583 = vmatpush1.msra.mxu0 0.0
        %584 = vmatprep.subr.mxu0 0.0
        %585 = vmatpush1.msra.mxu0 0.0
        %586 = vmatprep.subr.mxu0 0.0
        %587 = vmatpush1.msra.mxu0 0.0
        %588 = vmatprep.subr.mxu0 0.0
        %589 = vmatpush1.msra.mxu0 %v552
        %590 = vmatprep.subr.mxu0 0.0
        %591 = vmatpush1.msra.mxu0 %v551
        %592 = vmatprep.subr.mxu0 0.0
        %593 = vmatpush1.msra.mxu0 %v550
        %594 = vmatprep.subr.mxu0 0.0
        %595 = vmatpush1.msra.mxu0 %v549
        %596 = vmatprep.subr.mxu0 0.0
        %597 = vmatpush2.msra.mxu0 0.0
        %598 = vmatprep.subr.mxu0 0.0
        %599 = vmatpush2.msra.mxu0 0.0
        %600 = vmatprep.subr.mxu0 0.0
        %601 = vmatpush2.msra.mxu0 0.0
        %602 = vmatprep.subr.mxu0 0.0
        %603 = vmatpush2.msra.mxu0 0.0
        %604 = vmatprep.subr.mxu0 0.0
        %605 = vmatpush2.msra.mxu0 0.0
        %606 = vmatprep.subr.mxu0 0.0
        %607 = vmatpush2.msra.mxu0 0.0
        %608 = vmatprep.subr.mxu0 0.0
        %609 = vmatpush2.msra.mxu0 0.0
        %610 = vmatprep.subr.mxu0 0.0
        %611 = vmatpush2.msra.mxu0 0.0
        %612 = vmatprep.subr.mxu0 0.0
        %613 = vmatpush2.msra.mxu0 0.0
        %614 = vmatprep.subr.mxu0 0.0
        %615 = vmatpush2.msra.mxu0 0.0
        %616 = vmatprep.subr.mxu0 0.0
        %617 = vmatpush2.msra.mxu0 0.0
        %618 = vmatprep.subr.mxu0 0.0
        %619 = vmatpush2.msra.mxu0 0.0
        %620 = vmatprep.subr.mxu0 0.0
        %621 = vmatpush2.msra.mxu0 0.0
        %622 = vmatprep.subr.mxu0 0.0
        %623 = vmatpush2.msra.mxu0 0.0
        %624 = vmatprep.subr.mxu0 0.0
        %625 = vmatpush2.msra.mxu0 0.0
        %626 = vmatprep.subr.mxu0 0.0
        %627 = vmatpush2.msra.mxu0 0.0
        %628 = vmatprep.mubr.f32.mxu0 0.0
        %629 = vmatmul.mubr.f32.gmra.mxu0 %v562
        %v630 = vpop.f32.mrf.mxu0
        %v631 = vadd.f32 %v558, %v630
        %v632 = vpop.f32.mrf.mxu0
        %633 = vdwg.mxu0
        %v634 = vld [vmem:[%s483] sm:$0xff]
        %v635 = vld [vmem:[#allocation10] sm:$0xff]
        %v636 = vld [vmem:[#allocation10 + $0x8] sm:$0xff]
        %v637 = vld [vmem:[%s6] sm:$0x1]
        %v639 = vlaneseq
        %v640 = vshrl.u32 %v639, 7
        %v641 = vsub.s32 0, %v640
        %v642 = vrot.slane %v637, %v641
        %vm644 = vcmask 130048
        %v646 = vsel %vm644, %v634, 0
        %648 = vmatprep.subr.mxu0 0.0
        %649 = vmatpush1.msra.mxu0 0.0
        %650 = vmatprep.subr.mxu0 0.0
        %651 = vmatpush1.msra.mxu0 0.0
        %652 = vmatprep.subr.mxu0 0.0
        %653 = vmatpush1.msra.mxu0 0.0
        %654 = vmatprep.subr.mxu0 0.0
        %655 = vmatpush1.msra.mxu0 0.0
        %656 = vmatprep.subr.mxu0 0.0
        %657 = vmatpush1.msra.mxu0 0.0
        %658 = vmatprep.subr.mxu0 0.0
        %659 = vmatpush1.msra.mxu0 0.0
        %660 = vmatprep.subr.mxu0 0.0
        %661 = vmatpush1.msra.mxu0 0.0
        %662 = vmatprep.subr.mxu0 0.0
        %663 = vmatpush1.msra.mxu0 0.0
        %664 = vmatprep.subr.mxu0 0.0
        %665 = vmatpush1.msra.mxu0 0.0
        %666 = vmatprep.subr.mxu0 0.0
        %667 = vmatpush1.msra.mxu0 0.0
        %668 = vmatprep.subr.mxu0 0.0
        %669 = vmatpush1.msra.mxu0 0.0
        %670 = vmatprep.subr.mxu0 0.0
        %671 = vmatpush1.msra.mxu0 0.0
        %672 = vmatprep.subr.mxu0 0.0
        %673 = vmatpush1.msra.mxu0 0.0
        %674 = vmatprep.subr.mxu0 0.0
        %675 = vmatpush1.msra.mxu0 0.0
        %676 = vmatprep.subr.mxu0 0.0
        %677 = vmatpush1.msra.mxu0 %v636
        %678 = vmatprep.subr.mxu0 0.0
        %679 = vmatpush1.msra.mxu0 %v635
        %680 = vmatprep.subr.mxu0 0.0
        %681 = vmatpush2.msra.mxu0 0.0
        %682 = vmatprep.subr.mxu0 0.0
        %683 = vmatpush2.msra.mxu0 0.0
        %684 = vmatprep.subr.mxu0 0.0
        %685 = vmatpush2.msra.mxu0 0.0
        %686 = vmatprep.subr.mxu0 0.0
        %687 = vmatpush2.msra.mxu0 0.0
        %688 = vmatprep.subr.mxu0 0.0
        %689 = vmatpush2.msra.mxu0 0.0
        %690 = vmatprep.subr.mxu0 0.0
        %691 = vmatpush2.msra.mxu0 0.0
        %692 = vmatprep.subr.mxu0 0.0
        %693 = vmatpush2.msra.mxu0 0.0
        %694 = vmatprep.subr.mxu0 0.0
        %695 = vmatpush2.msra.mxu0 0.0
        %696 = vmatprep.subr.mxu0 0.0
        %697 = vmatpush2.msra.mxu0 0.0
        %698 = vmatprep.subr.mxu0 0.0
        %699 = vmatpush2.msra.mxu0 0.0
        %700 = vmatprep.subr.mxu0 0.0
        %701 = vmatpush2.msra.mxu0 0.0
        %702 = vmatprep.subr.mxu0 0.0
        %703 = vmatpush2.msra.mxu0 0.0
        %704 = vmatprep.subr.mxu0 0.0
        %705 = vmatpush2.msra.mxu0 0.0
        %706 = vmatprep.subr.mxu0 0.0
        %707 = vmatpush2.msra.mxu0 0.0
        %708 = vmatprep.subr.mxu0 0.0
        %709 = vmatpush2.msra.mxu0 0.0
        %710 = vmatprep.subr.mxu0 0.0
        %711 = vmatpush2.msra.mxu0 0.0
        %712 = vmatprep.mubr.f32.mxu0 0.0
        %713 = vmatmul.mubr.f32.gmra.mxu0 %v646
        %v714 = vpop.f32.mrf.mxu0
        %v715 = vadd.f32 %v642, %v714
        %v716 = vpop.f32.mrf.mxu0
        %717 = vdwg.mxu0
        %v718 = vld [vmem:[%s474] sm:$0xff]
        %v719 = vld [vmem:[#allocation11] sm:$0xff]
        %v720 = vld [vmem:[#allocation11 + $0x8] sm:$0xff]
        %v721 = vld [vmem:[#allocation11 + $0x10] sm:$0xff]
        %v722 = vld [vmem:[#allocation11 + $0x18] sm:$0xff]
        %v723 = vld [vmem:[%s8] sm:$0x1]
        %v725 = vlaneseq
        %v726 = vshrl.u32 %v725, 7
        %v727 = vsub.s32 0, %v726
        %v728 = vrot.slane %v723, %v727
        %v731 = vsel %vm560, %v718, 0
        %733 = vmatprep.subr.mxu0 0.0
        %734 = vmatpush1.msra.mxu0 0.0
        %735 = vmatprep.subr.mxu0 0.0
        %736 = vmatpush1.msra.mxu0 0.0
        %737 = vmatprep.subr.mxu0 0.0
        %738 = vmatpush1.msra.mxu0 0.0
        %739 = vmatprep.subr.mxu0 0.0
        %740 = vmatpush1.msra.mxu0 0.0
        %741 = vmatprep.subr.mxu0 0.0
        %742 = vmatpush1.msra.mxu0 0.0
        %743 = vmatprep.subr.mxu0 0.0
        %744 = vmatpush1.msra.mxu0 0.0
        %745 = vmatprep.subr.mxu0 0.0
        %746 = vmatpush1.msra.mxu0 0.0
        %747 = vmatprep.subr.mxu0 0.0
        %748 = vmatpush1.msra.mxu0 0.0
        %749 = vmatprep.subr.mxu0 0.0
        %750 = vmatpush1.msra.mxu0 0.0
        %751 = vmatprep.subr.mxu0 0.0
        %752 = vmatpush1.msra.mxu0 0.0
        %753 = vmatprep.subr.mxu0 0.0
        %754 = vmatpush1.msra.mxu0 0.0
        %755 = vmatprep.subr.mxu0 0.0
        %756 = vmatpush1.msra.mxu0 0.0
        %757 = vmatprep.subr.mxu0 0.0
        %758 = vmatpush1.msra.mxu0 %v722
        %759 = vmatprep.subr.mxu0 0.0
        %760 = vmatpush1.msra.mxu0 %v721
        %761 = vmatprep.subr.mxu0 0.0
        %762 = vmatpush1.msra.mxu0 %v720
        %763 = vmatprep.subr.mxu0 0.0
        %764 = vmatpush1.msra.mxu0 %v719
        %765 = vmatprep.subr.mxu0 0.0
        %766 = vmatpush2.msra.mxu0 0.0
        %767 = vmatprep.subr.mxu0 0.0
        %768 = vmatpush2.msra.mxu0 0.0
        %769 = vmatprep.subr.mxu0 0.0
        %770 = vmatpush2.msra.mxu0 0.0
        %771 = vmatprep.subr.mxu0 0.0
        %772 = vmatpush2.msra.mxu0 0.0
        %773 = vmatprep.subr.mxu0 0.0
        %774 = vmatpush2.msra.mxu0 0.0
        %775 = vmatprep.subr.mxu0 0.0
        %776 = vmatpush2.msra.mxu0 0.0
        %777 = vmatprep.subr.mxu0 0.0
        %778 = vmatpush2.msra.mxu0 0.0
        %779 = vmatprep.subr.mxu0 0.0
        %780 = vmatpush2.msra.mxu0 0.0
        %781 = vmatprep.subr.mxu0 0.0
        %782 = vmatpush2.msra.mxu0 0.0
        %783 = vmatprep.subr.mxu0 0.0
        %784 = vmatpush2.msra.mxu0 0.0
        %785 = vmatprep.subr.mxu0 0.0
        %786 = vmatpush2.msra.mxu0 0.0
        %787 = vmatprep.subr.mxu0 0.0
        %788 = vmatpush2.msra.mxu0 0.0
        %789 = vmatprep.subr.mxu0 0.0
        %790 = vmatpush2.msra.mxu0 0.0
        %791 = vmatprep.subr.mxu0 0.0
        %792 = vmatpush2.msra.mxu0 0.0
        %793 = vmatprep.subr.mxu0 0.0
        %794 = vmatpush2.msra.mxu0 0.0
        %795 = vmatprep.subr.mxu0 0.0
        %796 = vmatpush2.msra.mxu0 0.0
        %797 = vmatprep.mubr.f32.mxu0 0.0
        %798 = vmatmul.mubr.f32.gmra.mxu0 %v731
        %v799 = vpop.f32.mrf.mxu0
        %v800 = vadd.f32 %v728, %v799
        %v801 = vpop.f32.mrf.mxu0
        %802 = vdwg.mxu0
        %vm803 = vcmask 64512
        %v805 = vsel %vm803, %v631, 0
        %v808 = vsel %vm803, %v715, 0
        %810 = vmatprep.subr.mxu0 0.0
        %811 = vmatpush1.xpose.msra.mxu0 0.0
        %812 = vmatprep.subr.mxu0 0.0
        %813 = vmatpush1.xpose.msra.mxu0 0.0
        %814 = vmatprep.subr.mxu0 0.0
        %815 = vmatpush1.xpose.msra.mxu0 0.0
        %816 = vmatprep.subr.mxu0 0.0
        %817 = vmatpush1.xpose.msra.mxu0 0.0
        %818 = vmatprep.subr.mxu0 0.0
        %819 = vmatpush1.xpose.msra.mxu0 0.0
        %820 = vmatprep.subr.mxu0 0.0
        %821 = vmatpush1.xpose.msra.mxu0 0.0
        %822 = vmatprep.subr.mxu0 0.0
        %823 = vmatpush1.xpose.msra.mxu0 0.0
        %824 = vmatprep.subr.mxu0 0.0
        %825 = vmatpush1.xpose.msra.mxu0 0.0
        %826 = vmatprep.subr.mxu0 0.0
        %827 = vmatpush1.xpose.msra.mxu0 0.0
        %828 = vmatprep.subr.mxu0 0.0
        %829 = vmatpush1.xpose.msra.mxu0 0.0
        %830 = vmatprep.subr.mxu0 0.0
        %831 = vmatpush1.xpose.msra.mxu0 0.0
        %832 = vmatprep.subr.mxu0 0.0
        %833 = vmatpush1.xpose.msra.mxu0 0.0
        %834 = vmatprep.subr.mxu0 0.0
        %835 = vmatpush1.xpose.msra.mxu0 0.0
        %836 = vmatprep.subr.mxu0 0.0
        %837 = vmatpush1.xpose.msra.mxu0 0.0
        %838 = vmatprep.subr.mxu0 0.0
        %839 = vmatpush1.xpose.msra.mxu0 0.0
        %840 = vmatprep.subr.mxu0 0.0
        %841 = vmatpush1.xpose.msra.mxu0 %v808
        %842 = vmatprep.subr.mxu0 0.0
        %843 = vmatpush2.xpose.msra.mxu0 0.0
        %844 = vmatprep.subr.mxu0 0.0
        %845 = vmatpush2.xpose.msra.mxu0 0.0
        %846 = vmatprep.subr.mxu0 0.0
        %847 = vmatpush2.xpose.msra.mxu0 0.0
        %848 = vmatprep.subr.mxu0 0.0
        %849 = vmatpush2.xpose.msra.mxu0 0.0
        %850 = vmatprep.subr.mxu0 0.0
        %851 = vmatpush2.xpose.msra.mxu0 0.0
        %852 = vmatprep.subr.mxu0 0.0
        %853 = vmatpush2.xpose.msra.mxu0 0.0
        %854 = vmatprep.subr.mxu0 0.0
        %855 = vmatpush2.xpose.msra.mxu0 0.0
        %856 = vmatprep.subr.mxu0 0.0
        %857 = vmatpush2.xpose.msra.mxu0 0.0
        %858 = vmatprep.subr.mxu0 0.0
        %859 = vmatpush2.xpose.msra.mxu0 0.0
        %860 = vmatprep.subr.mxu0 0.0
        %861 = vmatpush2.xpose.msra.mxu0 0.0
        %862 = vmatprep.subr.mxu0 0.0
        %863 = vmatpush2.xpose.msra.mxu0 0.0
        %864 = vmatprep.subr.mxu0 0.0
        %865 = vmatpush2.xpose.msra.mxu0 0.0
        %866 = vmatprep.subr.mxu0 0.0
        %867 = vmatpush2.xpose.msra.mxu0 0.0
        %868 = vmatprep.subr.mxu0 0.0
        %869 = vmatpush2.xpose.msra.mxu0 0.0
        %870 = vmatprep.subr.mxu0 0.0
        %871 = vmatpush2.xpose.msra.mxu0 0.0
        %872 = vmatprep.subr.mxu0 0.0
        %873 = vmatpush2.xpose.msra.mxu0 0.0
        %874 = vmatprep.mubr.f32.mxu0 0.0
        %875 = vmatmul.mubr.f32.gmra.mxu0 %v805
        %v876 = vpop.f32.mrf.mxu0
        %v877 = vadd.f32 0.0, %v876
        %v878 = vpop.f32.mrf.mxu0
        %879 = vdwg.mxu0
        %v880 = vmul.f32 %v877, 0.35355338
        %v881 = vsel %vm803, %v880, -inf
        %882 = vmax.xlane.f32.xlu0 %v881
        %v883 = vpop.xlane.xlu0 %882
        %v884 = vsub.f32 %v880, %v883
        %v885 = vmul.f32 %v884, 1.442695
        %v886 = vpow.pop %v885
        %v887 = vsel %vm803, %v886, 0.0
        %888 = vadd.xlane.f32.xlu0 %v887
        %v889 = vpop.xlane.xlu0 %888
        %v890 = vrcp.pop %v889
        %v891 = vmul.f32 %v886, %v890
        %v893 = vsel %vm803, %v891, 0
        %895 = vmatprep.subr.mxu0 0.0
        %896 = vmatpush1.msra.mxu0 0.0
        %897 = vmatprep.subr.mxu0 0.0
        %898 = vmatpush1.msra.mxu0 0.0
        %899 = vmatprep.subr.mxu0 0.0
        %900 = vmatpush1.msra.mxu0 0.0
        %901 = vmatprep.subr.mxu0 0.0
        %902 = vmatpush1.msra.mxu0 0.0
        %903 = vmatprep.subr.mxu0 0.0
        %904 = vmatpush1.msra.mxu0 0.0
        %905 = vmatprep.subr.mxu0 0.0
        %906 = vmatpush1.msra.mxu0 0.0
        %907 = vmatprep.subr.mxu0 0.0
        %908 = vmatpush1.msra.mxu0 0.0
        %909 = vmatprep.subr.mxu0 0.0
        %910 = vmatpush1.msra.mxu0 0.0
        %911 = vmatprep.subr.mxu0 0.0
        %912 = vmatpush1.msra.mxu0 0.0
        %913 = vmatprep.subr.mxu0 0.0
        %914 = vmatpush1.msra.mxu0 0.0
        %915 = vmatprep.subr.mxu0 0.0
        %916 = vmatpush1.msra.mxu0 0.0
        %917 = vmatprep.subr.mxu0 0.0
        %918 = vmatpush1.msra.mxu0 0.0
        %919 = vmatprep.subr.mxu0 0.0
        %920 = vmatpush1.msra.mxu0 0.0
        %921 = vmatprep.subr.mxu0 0.0
        %922 = vmatpush1.msra.mxu0 0.0
        %923 = vmatprep.subr.mxu0 0.0
        %924 = vmatpush1.msra.mxu0 0.0
        %925 = vmatprep.subr.mxu0 0.0
        %926 = vmatpush1.msra.mxu0 %v800
        %927 = vmatprep.subr.mxu0 0.0
        %928 = vmatpush2.msra.mxu0 0.0
        %929 = vmatprep.subr.mxu0 0.0
        %930 = vmatpush2.msra.mxu0 0.0
        %931 = vmatprep.subr.mxu0 0.0
        %932 = vmatpush2.msra.mxu0 0.0
        %933 = vmatprep.subr.mxu0 0.0
        %934 = vmatpush2.msra.mxu0 0.0
        %935 = vmatprep.subr.mxu0 0.0
        %936 = vmatpush2.msra.mxu0 0.0
        %937 = vmatprep.subr.mxu0 0.0
        %938 = vmatpush2.msra.mxu0 0.0
        %939 = vmatprep.subr.mxu0 0.0
        %940 = vmatpush2.msra.mxu0 0.0
        %941 = vmatprep.subr.mxu0 0.0
        %942 = vmatpush2.msra.mxu0 0.0
        %943 = vmatprep.subr.mxu0 0.0
        %944 = vmatpush2.msra.mxu0 0.0
        %945 = vmatprep.subr.mxu0 0.0
        %946 = vmatpush2.msra.mxu0 0.0
        %947 = vmatprep.subr.mxu0 0.0
        %948 = vmatpush2.msra.mxu0 0.0
        %949 = vmatprep.subr.mxu0 0.0
        %950 = vmatpush2.msra.mxu0 0.0
        %951 = vmatprep.subr.mxu0 0.0
        %952 = vmatpush2.msra.mxu0 0.0
        %953 = vmatprep.subr.mxu0 0.0
        %954 = vmatpush2.msra.mxu0 0.0
        %955 = vmatprep.subr.mxu0 0.0
        %956 = vmatpush2.msra.mxu0 0.0
        %957 = vmatprep.subr.mxu0 0.0
        %958 = vmatpush2.msra.mxu0 0.0
        %959 = vmatprep.mubr.f32.mxu0 0.0
        %960 = vmatmul.mubr.f32.gmra.mxu0 %v893
        %v961 = vpop.f32.mrf.mxu0
        %v962 = vadd.f32 0.0, %v961
        %v963 = vpop.f32.mrf.mxu0
        %964 = vdwg.mxu0
        %965 = vrot.lane.b32.xlu0 %v631, 120
        %v966 = vpop.permute.xlu0 %965
        %967 = vrot.lane.b32.xlu0 %v715, 120
        %v968 = vpop.permute.xlu0 %967
        %v969 = vsel %vm803, %v966, 0
        %v971 = vsel %vm803, %v968, 0
        %973 = vmatprep.subr.mxu0 0.0
        %974 = vmatpush1.xpose.msra.mxu0 0.0
        %975 = vmatprep.subr.mxu0 0.0
        %976 = vmatpush1.xpose.msra.mxu0 0.0
        %977 = vmatprep.subr.mxu0 0.0
        %978 = vmatpush1.xpose.msra.mxu0 0.0
        %979 = vmatprep.subr.mxu0 0.0
        %980 = vmatpush1.xpose.msra.mxu0 0.0
        %981 = vmatprep.subr.mxu0 0.0
        %982 = vmatpush1.xpose.msra.mxu0 0.0
        %983 = vmatprep.subr.mxu0 0.0
        %984 = vmatpush1.xpose.msra.mxu0 0.0
        %985 = vmatprep.subr.mxu0 0.0
        %986 = vmatpush1.xpose.msra.mxu0 0.0
        %987 = vmatprep.subr.mxu0 0.0
        %988 = vmatpush1.xpose.msra.mxu0 0.0
        %989 = vmatprep.subr.mxu0 0.0
        %990 = vmatpush1.xpose.msra.mxu0 0.0
        %991 = vmatprep.subr.mxu0 0.0
        %992 = vmatpush1.xpose.msra.mxu0 0.0
        %993 = vmatprep.subr.mxu0 0.0
        %994 = vmatpush1.xpose.msra.mxu0 0.0
        %995 = vmatprep.subr.mxu0 0.0
        %996 = vmatpush1.xpose.msra.mxu0 0.0
        %997 = vmatprep.subr.mxu0 0.0
        %998 = vmatpush1.xpose.msra.mxu0 0.0
        %999 = vmatprep.subr.mxu0 0.0
        %1000 = vmatpush1.xpose.msra.mxu0 0.0
        %1001 = vmatprep.subr.mxu0 0.0
        %1002 = vmatpush1.xpose.msra.mxu0 0.0
        %1003 = vmatprep.subr.mxu0 0.0
        %1004 = vmatpush1.xpose.msra.mxu0 %v971
        %1005 = vmatprep.subr.mxu0 0.0
        %1006 = vmatpush2.xpose.msra.mxu0 0.0
        %1007 = vmatprep.subr.mxu0 0.0
        %1008 = vmatpush2.xpose.msra.mxu0 0.0
        %1009 = vmatprep.subr.mxu0 0.0
        %1010 = vmatpush2.xpose.msra.mxu0 0.0
        %1011 = vmatprep.subr.mxu0 0.0
        %1012 = vmatpush2.xpose.msra.mxu0 0.0
        %1013 = vmatprep.subr.mxu0 0.0
        %1014 = vmatpush2.xpose.msra.mxu0 0.0
        %1015 = vmatprep.subr.mxu0 0.0
        %1016 = vmatpush2.xpose.msra.mxu0 0.0
        %1017 = vmatprep.subr.mxu0 0.0
        %1018 = vmatpush2.xpose.msra.mxu0 0.0
        %1019 = vmatprep.subr.mxu0 0.0
        %1020 = vmatpush2.xpose.msra.mxu0 0.0
        %1021 = vmatprep.subr.mxu0 0.0
        %1022 = vmatpush2.xpose.msra.mxu0 0.0
        %1023 = vmatprep.subr.mxu0 0.0
        %1024 = vmatpush2.xpose.msra.mxu0 0.0
        %1025 = vmatprep.subr.mxu0 0.0
        %1026 = vmatpush2.xpose.msra.mxu0 0.0
        %1027 = vmatprep.subr.mxu0 0.0
        %1028 = vmatpush2.xpose.msra.mxu0 0.0
        %1029 = vmatprep.subr.mxu0 0.0
        %1030 = vmatpush2.xpose.msra.mxu0 0.0
        %1031 = vmatprep.subr.mxu0 0.0
        %1032 = vmatpush2.xpose.msra.mxu0 0.0
        %1033 = vmatprep.subr.mxu0 0.0
        %1034 = vmatpush2.xpose.msra.mxu0 0.0
        %1035 = vmatprep.subr.mxu0 0.0
        %1036 = vmatpush2.xpose.msra.mxu0 0.0
        %1037 = vmatprep.mubr.f32.mxu0 0.0
        %1038 = vmatmul.mubr.f32.gmra.mxu0 %v969
        %v1039 = vpop.f32.mrf.mxu0
        %v1040 = vadd.f32 0.0, %v1039
        %v1041 = vpop.f32.mrf.mxu0
        %1042 = vdwg.mxu0
        %v1043 = vmul.f32 %v1040, 0.35355338
        %v1044 = vsel %vm803, %v1043, -inf
        %1045 = vmax.xlane.f32.xlu0 %v1044
        %v1046 = vpop.xlane.xlu0 %1045
        %v1047 = vsub.f32 %v1043, %v1046
        %v1048 = vmul.f32 %v1047, 1.442695
        %v1049 = vpow.pop %v1048
        %v1050 = vsel %vm803, %v1049, 0.0
        %1051 = vadd.xlane.f32.xlu0 %v1050
        %v1052 = vpop.xlane.xlu0 %1051
        %v1053 = vrcp.pop %v1052
        %v1054 = vmul.f32 %v1049, %v1053
        %1056 = vrot.lane.b32.xlu0 %v800, 120
        %v1057 = vpop.permute.xlu0 %1056
        %v1060 = vsel %vm803, %v1054, 0
        %1062 = vmatprep.subr.mxu0 0.0
        %1063 = vmatpush1.msra.mxu0 0.0
        %1064 = vmatprep.subr.mxu0 0.0
        %1065 = vmatpush1.msra.mxu0 0.0
        %1066 = vmatprep.subr.mxu0 0.0
        %1067 = vmatpush1.msra.mxu0 0.0
        %1068 = vmatprep.subr.mxu0 0.0
        %1069 = vmatpush1.msra.mxu0 0.0
        %1070 = vmatprep.subr.mxu0 0.0
        %1071 = vmatpush1.msra.mxu0 0.0
        %1072 = vmatprep.subr.mxu0 0.0
        %1073 = vmatpush1.msra.mxu0 0.0
        %1074 = vmatprep.subr.mxu0 0.0
        %1075 = vmatpush1.msra.mxu0 0.0
        %1076 = vmatprep.subr.mxu0 0.0
        %1077 = vmatpush1.msra.mxu0 0.0
        %1078 = vmatprep.subr.mxu0 0.0
        %1079 = vmatpush1.msra.mxu0 0.0
        %1080 = vmatprep.subr.mxu0 0.0
        %1081 = vmatpush1.msra.mxu0 0.0
        %1082 = vmatprep.subr.mxu0 0.0
        %1083 = vmatpush1.msra.mxu0 0.0
        %1084 = vmatprep.subr.mxu0 0.0
        %1085 = vmatpush1.msra.mxu0 0.0
        %1086 = vmatprep.subr.mxu0 0.0
        %1087 = vmatpush1.msra.mxu0 0.0
        %1088 = vmatprep.subr.mxu0 0.0
        %1089 = vmatpush1.msra.mxu0 0.0
        %1090 = vmatprep.subr.mxu0 0.0
        %1091 = vmatpush1.msra.mxu0 0.0
        %1092 = vmatprep.subr.mxu0 0.0
        %1093 = vmatpush1.msra.mxu0 %v1057
        %1094 = vmatprep.subr.mxu0 0.0
        %1095 = vmatpush2.msra.mxu0 0.0
        %1096 = vmatprep.subr.mxu0 0.0
        %1097 = vmatpush2.msra.mxu0 0.0
        %1098 = vmatprep.subr.mxu0 0.0
        %1099 = vmatpush2.msra.mxu0 0.0
        %1100 = vmatprep.subr.mxu0 0.0
        %1101 = vmatpush2.msra.mxu0 0.0
        %1102 = vmatprep.subr.mxu0 0.0
        %1103 = vmatpush2.msra.mxu0 0.0
        %1104 = vmatprep.subr.mxu0 0.0
        %1105 = vmatpush2.msra.mxu0 0.0
        %1106 = vmatprep.subr.mxu0 0.0
        %1107 = vmatpush2.msra.mxu0 0.0
        %1108 = vmatprep.subr.mxu0 0.0
        %1109 = vmatpush2.msra.mxu0 0.0
        %1110 = vmatprep.subr.mxu0 0.0
        %1111 = vmatpush2.msra.mxu0 0.0
        %1112 = vmatprep.subr.mxu0 0.0
        %1113 = vmatpush2.msra.mxu0 0.0
        %1114 = vmatprep.subr.mxu0 0.0
        %1115 = vmatpush2.msra.mxu0 0.0
        %1116 = vmatprep.subr.mxu0 0.0
        %1117 = vmatpush2.msra.mxu0 0.0
        %1118 = vmatprep.subr.mxu0 0.0
        %1119 = vmatpush2.msra.mxu0 0.0
        %1120 = vmatprep.subr.mxu0 0.0
        %1121 = vmatpush2.msra.mxu0 0.0
        %1122 = vmatprep.subr.mxu0 0.0
        %1123 = vmatpush2.msra.mxu0 0.0
        %1124 = vmatprep.subr.mxu0 0.0
        %1125 = vmatpush2.msra.mxu0 0.0
        %1126 = vmatprep.mubr.f32.mxu0 0.0
        %1127 = vmatmul.mubr.f32.gmra.mxu0 %v1060
        %v1128 = vpop.f32.mrf.mxu0
        %v1129 = vadd.f32 0.0, %v1128
        %v1130 = vpop.f32.mrf.mxu0
        %1131 = vdwg.mxu0
        %1132 = vrot.lane.b32.xlu0 %v631, 112
        %v1133 = vpop.permute.xlu0 %1132
        %1134 = vrot.lane.b32.xlu0 %v715, 112
        %v1135 = vpop.permute.xlu0 %1134
        %v1136 = vsel %vm803, %v1133, 0
        %v1138 = vsel %vm803, %v1135, 0
        %1140 = vmatprep.subr.mxu0 0.0
        %1141 = vmatpush1.xpose.msra.mxu0 0.0
        %1142 = vmatprep.subr.mxu0 0.0
        %1143 = vmatpush1.xpose.msra.mxu0 0.0
        %1144 = vmatprep.subr.mxu0 0.0
        %1145 = vmatpush1.xpose.msra.mxu0 0.0
        %1146 = vmatprep.subr.mxu0 0.0
        %1147 = vmatpush1.xpose.msra.mxu0 0.0
        %1148 = vmatprep.subr.mxu0 0.0
        %1149 = vmatpush1.xpose.msra.mxu0 0.0
        %1150 = vmatprep.subr.mxu0 0.0
        %1151 = vmatpush1.xpose.msra.mxu0 0.0
        %1152 = vmatprep.subr.mxu0 0.0
        %1153 = vmatpush1.xpose.msra.mxu0 0.0
        %1154 = vmatprep.subr.mxu0 0.0
        %1155 = vmatpush1.xpose.msra.mxu0 0.0
        %1156 = vmatprep.subr.mxu0 0.0
        %1157 = vmatpush1.xpose.msra.mxu0 0.0
        %1158 = vmatprep.subr.mxu0 0.0
        %1159 = vmatpush1.xpose.msra.mxu0 0.0
        %1160 = vmatprep.subr.mxu0 0.0
        %1161 = vmatpush1.xpose.msra.mxu0 0.0
        %1162 = vmatprep.subr.mxu0 0.0
        %1163 = vmatpush1.xpose.msra.mxu0 0.0
        %1164 = vmatprep.subr.mxu0 0.0
        %1165 = vmatpush1.xpose.msra.mxu0 0.0
        %1166 = vmatprep.subr.mxu0 0.0
        %1167 = vmatpush1.xpose.msra.mxu0 0.0
        %1168 = vmatprep.subr.mxu0 0.0
        %1169 = vmatpush1.xpose.msra.mxu0 0.0
        %1170 = vmatprep.subr.mxu0 0.0
        %1171 = vmatpush1.xpose.msra.mxu0 %v1138
        %1172 = vmatprep.subr.mxu0 0.0
        %1173 = vmatpush2.xpose.msra.mxu0 0.0
        %1174 = vmatprep.subr.mxu0 0.0
        %1175 = vmatpush2.xpose.msra.mxu0 0.0
        %1176 = vmatprep.subr.mxu0 0.0
        %1177 = vmatpush2.xpose.msra.mxu0 0.0
        %1178 = vmatprep.subr.mxu0 0.0
        %1179 = vmatpush2.xpose.msra.mxu0 0.0
        %1180 = vmatprep.subr.mxu0 0.0
        %1181 = vmatpush2.xpose.msra.mxu0 0.0
        %1182 = vmatprep.subr.mxu0 0.0
        %1183 = vmatpush2.xpose.msra.mxu0 0.0
        %1184 = vmatprep.subr.mxu0 0.0
        %1185 = vmatpush2.xpose.msra.mxu0 0.0
        %1186 = vmatprep.subr.mxu0 0.0
        %1187 = vmatpush2.xpose.msra.mxu0 0.0
        %1188 = vmatprep.subr.mxu0 0.0
        %1189 = vmatpush2.xpose.msra.mxu0 0.0
        %1190 = vmatprep.subr.mxu0 0.0
        %1191 = vmatpush2.xpose.msra.mxu0 0.0
        %1192 = vmatprep.subr.mxu0 0.0
        %1193 = vmatpush2.xpose.msra.mxu0 0.0
        %1194 = vmatprep.subr.mxu0 0.0
        %1195 = vmatpush2.xpose.msra.mxu0 0.0
        %1196 = vmatprep.subr.mxu0 0.0
        %1197 = vmatpush2.xpose.msra.mxu0 0.0
        %1198 = vmatprep.subr.mxu0 0.0
        %1199 = vmatpush2.xpose.msra.mxu0 0.0
        %1200 = vmatprep.subr.mxu0 0.0
        %1201 = vmatpush2.xpose.msra.mxu0 0.0
        %1202 = vmatprep.subr.mxu0 0.0
        %1203 = vmatpush2.xpose.msra.mxu0 0.0
        %1204 = vmatprep.mubr.f32.mxu0 0.0
        %1205 = vmatmul.mubr.f32.gmra.mxu0 %v1136
        %v1206 = vpop.f32.mrf.mxu0
        %v1207 = vadd.f32 0.0, %v1206
        %v1208 = vpop.f32.mrf.mxu0
        %1209 = vdwg.mxu0
        %v1210 = vmul.f32 %v1207, 0.35355338
        %v1211 = vsel %vm803, %v1210, -inf
        %1212 = vmax.xlane.f32.xlu0 %v1211
        %v1213 = vpop.xlane.xlu0 %1212
        %v1214 = vsub.f32 %v1210, %v1213
        %v1215 = vmul.f32 %v1214, 1.442695
        %v1216 = vpow.pop %v1215
        %v1217 = vsel %vm803, %v1216, 0.0
        %1218 = vadd.xlane.f32.xlu0 %v1217
        %v1219 = vpop.xlane.xlu0 %1218
        %v1220 = vrcp.pop %v1219
        %v1221 = vmul.f32 %v1216, %v1220
        %1222 = vrot.lane.b32.xlu0 %v800, 112
        %v1223 = vpop.permute.xlu0 %1222
        %v1226 = vsel %vm803, %v1221, 0
        %1228 = vmatprep.subr.mxu0 0.0
        %1229 = vmatpush1.msra.mxu0 0.0
        %1230 = vmatprep.subr.mxu0 0.0
        %1231 = vmatpush1.msra.mxu0 0.0
        %1232 = vmatprep.subr.mxu0 0.0
        %1233 = vmatpush1.msra.mxu0 0.0
        %1234 = vmatprep.subr.mxu0 0.0
        %1235 = vmatpush1.msra.mxu0 0.0
        %1236 = vmatprep.subr.mxu0 0.0
        %1237 = vmatpush1.msra.mxu0 0.0
        %1238 = vmatprep.subr.mxu0 0.0
        %1239 = vmatpush1.msra.mxu0 0.0
        %1240 = vmatprep.subr.mxu0 0.0
        %1241 = vmatpush1.msra.mxu0 0.0
        %1242 = vmatprep.subr.mxu0 0.0
        %1243 = vmatpush1.msra.mxu0 0.0
        %1244 = vmatprep.subr.mxu0 0.0
        %1245 = vmatpush1.msra.mxu0 0.0
        %1246 = vmatprep.subr.mxu0 0.0
        %1247 = vmatpush1.msra.mxu0 0.0
        %1248 = vmatprep.subr.mxu0 0.0
        %1249 = vmatpush1.msra.mxu0 0.0
        %1250 = vmatprep.subr.mxu0 0.0
        %1251 = vmatpush1.msra.mxu0 0.0
        %1252 = vmatprep.subr.mxu0 0.0
        %1253 = vmatpush1.msra.mxu0 0.0
        %1254 = vmatprep.subr.mxu0 0.0
        %1255 = vmatpush1.msra.mxu0 0.0
        %1256 = vmatprep.subr.mxu0 0.0
        %1257 = vmatpush1.msra.mxu0 0.0
        %1258 = vmatprep.subr.mxu0 0.0
        %1259 = vmatpush1.msra.mxu0 %v1223
        %1260 = vmatprep.subr.mxu0 0.0
        %1261 = vmatpush2.msra.mxu0 0.0
        %1262 = vmatprep.subr.mxu0 0.0
        %1263 = vmatpush2.msra.mxu0 0.0
        %1264 = vmatprep.subr.mxu0 0.0
        %1265 = vmatpush2.msra.mxu0 0.0
        %1266 = vmatprep.subr.mxu0 0.0
        %1267 = vmatpush2.msra.mxu0 0.0
        %1268 = vmatprep.subr.mxu0 0.0
        %1269 = vmatpush2.msra.mxu0 0.0
        %1270 = vmatprep.subr.mxu0 0.0
        %1271 = vmatpush2.msra.mxu0 0.0
        %1272 = vmatprep.subr.mxu0 0.0
        %1273 = vmatpush2.msra.mxu0 0.0
        %1274 = vmatprep.subr.mxu0 0.0
        %1275 = vmatpush2.msra.mxu0 0.0
        %1276 = vmatprep.subr.mxu0 0.0
        %1277 = vmatpush2.msra.mxu0 0.0
        %1278 = vmatprep.subr.mxu0 0.0
        %1279 = vmatpush2.msra.mxu0 0.0
        %1280 = vmatprep.subr.mxu0 0.0
        %1281 = vmatpush2.msra.mxu0 0.0
        %1282 = vmatprep.subr.mxu0 0.0
        %1283 = vmatpush2.msra.mxu0 0.0
        %1284 = vmatprep.subr.mxu0 0.0
        %1285 = vmatpush2.msra.mxu0 0.0
        %1286 = vmatprep.subr.mxu0 0.0
        %1287 = vmatpush2.msra.mxu0 0.0
        %1288 = vmatprep.subr.mxu0 0.0
        %1289 = vmatpush2.msra.mxu0 0.0
        %1290 = vmatprep.subr.mxu0 0.0
        %1291 = vmatpush2.msra.mxu0 0.0
        %1292 = vmatprep.mubr.f32.mxu0 0.0
        %1293 = vmatmul.mubr.f32.gmra.mxu0 %v1226
        %v1294 = vpop.f32.mrf.mxu0
        %v1295 = vadd.f32 0.0, %v1294
        %v1296 = vpop.f32.mrf.mxu0
        %1297 = vdwg.mxu0
        %1298 = vrot.lane.b32.xlu0 %v631, 104
        %v1299 = vpop.permute.xlu0 %1298
        %1300 = vrot.lane.b32.xlu0 %v715, 104
        %v1301 = vpop.permute.xlu0 %1300
        %v1302 = vsel %vm803, %v1299, 0
        %v1304 = vsel %vm803, %v1301, 0
        %1306 = vmatprep.subr.mxu0 0.0
        %1307 = vmatpush1.xpose.msra.mxu0 0.0
        %1308 = vmatprep.subr.mxu0 0.0
        %1309 = vmatpush1.xpose.msra.mxu0 0.0
        %1310 = vmatprep.subr.mxu0 0.0
        %1311 = vmatpush1.xpose.msra.mxu0 0.0
        %1312 = vmatprep.subr.mxu0 0.0
        %1313 = vmatpush1.xpose.msra.mxu0 0.0
        %1314 = vmatprep.subr.mxu0 0.0
        %1315 = vmatpush1.xpose.msra.mxu0 0.0
        %1316 = vmatprep.subr.mxu0 0.0
        %1317 = vmatpush1.xpose.msra.mxu0 0.0
        %1318 = vmatprep.subr.mxu0 0.0
        %1319 = vmatpush1.xpose.msra.mxu0 0.0
        %1320 = vmatprep.subr.mxu0 0.0
        %1321 = vmatpush1.xpose.msra.mxu0 0.0
        %1322 = vmatprep.subr.mxu0 0.0
        %1323 = vmatpush1.xpose.msra.mxu0 0.0
        %1324 = vmatprep.subr.mxu0 0.0
        %1325 = vmatpush1.xpose.msra.mxu0 0.0
        %1326 = vmatprep.subr.mxu0 0.0
        %1327 = vmatpush1.xpose.msra.mxu0 0.0
        %1328 = vmatprep.subr.mxu0 0.0
        %1329 = vmatpush1.xpose.msra.mxu0 0.0
        %1330 = vmatprep.subr.mxu0 0.0
        %1331 = vmatpush1.xpose.msra.mxu0 0.0
        %1332 = vmatprep.subr.mxu0 0.0
        %1333 = vmatpush1.xpose.msra.mxu0 0.0
        %1334 = vmatprep.subr.mxu0 0.0
        %1335 = vmatpush1.xpose.msra.mxu0 0.0
        %1336 = vmatprep.subr.mxu0 0.0
        %1337 = vmatpush1.xpose.msra.mxu0 %v1304
        %1338 = vmatprep.subr.mxu0 0.0
        %1339 = vmatpush2.xpose.msra.mxu0 0.0
        %1340 = vmatprep.subr.mxu0 0.0
        %1341 = vmatpush2.xpose.msra.mxu0 0.0
        %1342 = vmatprep.subr.mxu0 0.0
        %1343 = vmatpush2.xpose.msra.mxu0 0.0
        %1344 = vmatprep.subr.mxu0 0.0
        %1345 = vmatpush2.xpose.msra.mxu0 0.0
        %1346 = vmatprep.subr.mxu0 0.0
        %1347 = vmatpush2.xpose.msra.mxu0 0.0
        %1348 = vmatprep.subr.mxu0 0.0
        %1349 = vmatpush2.xpose.msra.mxu0 0.0
        %1350 = vmatprep.subr.mxu0 0.0
        %1351 = vmatpush2.xpose.msra.mxu0 0.0
        %1352 = vmatprep.subr.mxu0 0.0
        %1353 = vmatpush2.xpose.msra.mxu0 0.0
        %1354 = vmatprep.subr.mxu0 0.0
        %1355 = vmatpush2.xpose.msra.mxu0 0.0
        %1356 = vmatprep.subr.mxu0 0.0
        %1357 = vmatpush2.xpose.msra.mxu0 0.0
        %1358 = vmatprep.subr.mxu0 0.0
        %1359 = vmatpush2.xpose.msra.mxu0 0.0
        %1360 = vmatprep.subr.mxu0 0.0
        %1361 = vmatpush2.xpose.msra.mxu0 0.0
        %1362 = vmatprep.subr.mxu0 0.0
        %1363 = vmatpush2.xpose.msra.mxu0 0.0
        %1364 = vmatprep.subr.mxu0 0.0
        %1365 = vmatpush2.xpose.msra.mxu0 0.0
        %1366 = vmatprep.subr.mxu0 0.0
        %1367 = vmatpush2.xpose.msra.mxu0 0.0
        %1368 = vmatprep.subr.mxu0 0.0
        %1369 = vmatpush2.xpose.msra.mxu0 0.0
        %1370 = vmatprep.mubr.f32.mxu0 0.0
        %1371 = vmatmul.mubr.f32.gmra.mxu0 %v1302
        %v1372 = vpop.f32.mrf.mxu0
        %v1373 = vadd.f32 0.0, %v1372
        %v1374 = vpop.f32.mrf.mxu0
        %1375 = vdwg.mxu0
        %v1376 = vmul.f32 %v1373, 0.35355338
        %v1377 = vsel %vm803, %v1376, -inf
        %1378 = vmax.xlane.f32.xlu0 %v1377
        %v1379 = vpop.xlane.xlu0 %1378
        %v1380 = vsub.f32 %v1376, %v1379
        %v1381 = vmul.f32 %v1380, 1.442695
        %v1382 = vpow.pop %v1381
        %v1383 = vsel %vm803, %v1382, 0.0
        %1384 = vadd.xlane.f32.xlu0 %v1383
        %v1385 = vpop.xlane.xlu0 %1384
        %v1386 = vrcp.pop %v1385
        %v1387 = vmul.f32 %v1382, %v1386
        %1388 = vrot.lane.b32.xlu0 %v800, 104
        %v1389 = vpop.permute.xlu0 %1388
        %v1392 = vsel %vm803, %v1387, 0
        %1394 = vmatprep.subr.mxu0 0.0
        %1395 = vmatpush1.msra.mxu0 0.0
        %1396 = vmatprep.subr.mxu0 0.0
        %1397 = vmatpush1.msra.mxu0 0.0
        %1398 = vmatprep.subr.mxu0 0.0
        %1399 = vmatpush1.msra.mxu0 0.0
        %1400 = vmatprep.subr.mxu0 0.0
        %1401 = vmatpush1.msra.mxu0 0.0
        %1402 = vmatprep.subr.mxu0 0.0
        %1403 = vmatpush1.msra.mxu0 0.0
        %1404 = vmatprep.subr.mxu0 0.0
        %1405 = vmatpush1.msra.mxu0 0.0
        %1406 = vmatprep.subr.mxu0 0.0
        %1407 = vmatpush1.msra.mxu0 0.0
        %1408 = vmatprep.subr.mxu0 0.0
        %1409 = vmatpush1.msra.mxu0 0.0
        %1410 = vmatprep.subr.mxu0 0.0
        %1411 = vmatpush1.msra.mxu0 0.0
        %1412 = vmatprep.subr.mxu0 0.0
        %1413 = vmatpush1.msra.mxu0 0.0
        %1414 = vmatprep.subr.mxu0 0.0
        %1415 = vmatpush1.msra.mxu0 0.0
        %1416 = vmatprep.subr.mxu0 0.0
        %1417 = vmatpush1.msra.mxu0 0.0
        %1418 = vmatprep.subr.mxu0 0.0
        %1419 = vmatpush1.msra.mxu0 0.0
        %1420 = vmatprep.subr.mxu0 0.0
        %1421 = vmatpush1.msra.mxu0 0.0
        %1422 = vmatprep.subr.mxu0 0.0
        %1423 = vmatpush1.msra.mxu0 0.0
        %1424 = vmatprep.subr.mxu0 0.0
        %1425 = vmatpush1.msra.mxu0 %v1389
        %1426 = vmatprep.subr.mxu0 0.0
        %1427 = vmatpush2.msra.mxu0 0.0
        %1428 = vmatprep.subr.mxu0 0.0
        %1429 = vmatpush2.msra.mxu0 0.0
        %1430 = vmatprep.subr.mxu0 0.0
        %1431 = vmatpush2.msra.mxu0 0.0
        %1432 = vmatprep.subr.mxu0 0.0
        %1433 = vmatpush2.msra.mxu0 0.0
        %1434 = vmatprep.subr.mxu0 0.0
        %1435 = vmatpush2.msra.mxu0 0.0
        %1436 = vmatprep.subr.mxu0 0.0
        %1437 = vmatpush2.msra.mxu0 0.0
        %1438 = vmatprep.subr.mxu0 0.0
        %1439 = vmatpush2.msra.mxu0 0.0
        %1440 = vmatprep.subr.mxu0 0.0
        %1441 = vmatpush2.msra.mxu0 0.0
        %1442 = vmatprep.subr.mxu0 0.0
        %1443 = vmatpush2.msra.mxu0 0.0
        %1444 = vmatprep.subr.mxu0 0.0
        %1445 = vmatpush2.msra.mxu0 0.0
        %1446 = vmatprep.subr.mxu0 0.0
        %1447 = vmatpush2.msra.mxu0 0.0
        %1448 = vmatprep.subr.mxu0 0.0
        %1449 = vmatpush2.msra.mxu0 0.0
        %1450 = vmatprep.subr.mxu0 0.0
        %1451 = vmatpush2.msra.mxu0 0.0
        %1452 = vmatprep.subr.mxu0 0.0
        %1453 = vmatpush2.msra.mxu0 0.0
        %1454 = vmatprep.subr.mxu0 0.0
        %1455 = vmatpush2.msra.mxu0 0.0
        %1456 = vmatprep.subr.mxu0 0.0
        %1457 = vmatpush2.msra.mxu0 0.0
        %1458 = vmatprep.mubr.f32.mxu0 0.0
        %1459 = vmatmul.mubr.f32.gmra.mxu0 %v1392
        %v1460 = vpop.f32.mrf.mxu0
        %v1461 = vadd.f32 0.0, %v1460
        %v1462 = vpop.f32.mrf.mxu0
        %1463 = vdwg.mxu0
        %1465 = vrot.lane.b32.xlu0 %v1129, 8
        %v1466 = vpop.permute.xlu0 %1465
        %1469 = vrot.lane.b32.xlu0 %v1295, 16
        %v1470 = vpop.permute.xlu0 %1469
        %1473 = vrot.lane.b32.xlu0 %v1461, 24
        %v1474 = vpop.permute.xlu0 %1473
        %v1476 = vsel %vm803, %v962, %v1466
        %v1477 = vsel %vm644, %v1476, %v1470
        %vm1478 = vcmask 195584
        %v1479 = vsel %vm1478, %v1477, %v1474
        %v1480 = vmax.f32 %v1479, 0.0
        %v1481 = vld [vmem:[#allocation13] sm:$0xff]
        %v1482 = vld [vmem:[#allocation13 + $0x8] sm:$0xff]
        %v1483 = vld [vmem:[#allocation13 + $0x10] sm:$0xff]
        %v1484 = vld [vmem:[#allocation13 + $0x18] sm:$0xff]
        %v1485 = vld [vmem:[%s10] sm:$0x1]
        %v1487 = vlaneseq
        %v1488 = vshrl.u32 %v1487, 7
        %v1489 = vsub.s32 0, %v1488
        %v1490 = vrot.slane %v1485, %v1489
        %v1493 = vsel %vm560, %v1480, 0
        %1495 = vmatprep.subr.mxu0 0.0
        %1496 = vmatpush1.msra.mxu0 0.0
        %1497 = vmatprep.subr.mxu0 0.0
        %1498 = vmatpush1.msra.mxu0 0.0
        %1499 = vmatprep.subr.mxu0 0.0
        %1500 = vmatpush1.msra.mxu0 0.0
        %1501 = vmatprep.subr.mxu0 0.0
        %1502 = vmatpush1.msra.mxu0 0.0
        %1503 = vmatprep.subr.mxu0 0.0
        %1504 = vmatpush1.msra.mxu0 0.0
        %1505 = vmatprep.subr.mxu0 0.0
        %1506 = vmatpush1.msra.mxu0 0.0
        %1507 = vmatprep.subr.mxu0 0.0
        %1508 = vmatpush1.msra.mxu0 0.0
        %1509 = vmatprep.subr.mxu0 0.0
        %1510 = vmatpush1.msra.mxu0 0.0
        %1511 = vmatprep.subr.mxu0 0.0
        %1512 = vmatpush1.msra.mxu0 0.0
        %1513 = vmatprep.subr.mxu0 0.0
        %1514 = vmatpush1.msra.mxu0 0.0
        %1515 = vmatprep.subr.mxu0 0.0
        %1516 = vmatpush1.msra.mxu0 0.0
        %1517 = vmatprep.subr.mxu0 0.0
        %1518 = vmatpush1.msra.mxu0 0.0
        %1519 = vmatprep.subr.mxu0 0.0
        %1520 = vmatpush1.msra.mxu0 %v1484
        %1521 = vmatprep.subr.mxu0 0.0
        %1522 = vmatpush1.msra.mxu0 %v1483
        %1523 = vmatprep.subr.mxu0 0.0
        %1524 = vmatpush1.msra.mxu0 %v1482
        %1525 = vmatprep.subr.mxu0 0.0
        %1526 = vmatpush1.msra.mxu0 %v1481
        %1527 = vmatprep.subr.mxu0 0.0
        %1528 = vmatpush2.msra.mxu0 0.0
        %1529 = vmatprep.subr.mxu0 0.0
        %1530 = vmatpush2.msra.mxu0 0.0
        %1531 = vmatprep.subr.mxu0 0.0
        %1532 = vmatpush2.msra.mxu0 0.0
        %1533 = vmatprep.subr.mxu0 0.0
        %1534 = vmatpush2.msra.mxu0 0.0
        %1535 = vmatprep.subr.mxu0 0.0
        %1536 = vmatpush2.msra.mxu0 0.0
        %1537 = vmatprep.subr.mxu0 0.0
        %1538 = vmatpush2.msra.mxu0 0.0
        %1539 = vmatprep.subr.mxu0 0.0
        %1540 = vmatpush2.msra.mxu0 0.0
        %1541 = vmatprep.subr.mxu0 0.0
        %1542 = vmatpush2.msra.mxu0 0.0
        %1543 = vmatprep.subr.mxu0 0.0
        %1544 = vmatpush2.msra.mxu0 0.0
        %1545 = vmatprep.subr.mxu0 0.0
        %1546 = vmatpush2.msra.mxu0 0.0
        %1547 = vmatprep.subr.mxu0 0.0
        %1548 = vmatpush2.msra.mxu0 0.0
        %1549 = vmatprep.subr.mxu0 0.0
        %1550 = vmatpush2.msra.mxu0 0.0
        %1551 = vmatprep.subr.mxu0 0.0
        %1552 = vmatpush2.msra.mxu0 0.0
        %1553 = vmatprep.subr.mxu0 0.0
        %1554 = vmatpush2.msra.mxu0 0.0
        %1555 = vmatprep.subr.mxu0 0.0
        %1556 = vmatpush2.msra.mxu0 0.0
        %1557 = vmatprep.subr.mxu0 0.0
        %1558 = vmatpush2.msra.mxu0 0.0
        %1559 = vmatprep.mubr.f32.mxu0 0.0
        %1560 = vmatmul.mubr.f32.gmra.mxu0 %v1493
        %v1561 = vpop.f32.mrf.mxu0
        %v1562 = vadd.f32 %v1490, %v1561
        %v1563 = vpop.f32.mrf.mxu0
        %1564 = vdwg.mxu0
        %1565 = vst [vmem:[%s547] sm:$0xff] %v1562
        %s1566 = sand.u32 %s303, 1
        %s1567 = scalar_lea.sflag [#allocation4], %s1566
        %s1568 = sand.u32 %s303, 1
        %s1569 = smul.addr %s1568, 8
        %s1570 = scalar_lea.vmem [#allocation14], %s1569
        // Predicated region
        $region93: #{tpu_custom_call.1} parent=63 // pred_check
          %p1571 = pneg %p313
        $region94: #{tpu_custom_call.1} parent=63 // pred_check_branch
          %1573 = sbr.rel (%p1571) target = $region96
        $region95: #{tpu_custom_call.1} parent=63 // pred_region
          %s1575 = ssub.s32 128, 128
          %1576 = vsyncadd %s1567, %s1575
          %s1577 = sadd.s32 %s38, %s37
          %s1578 = smul.addr %s1577, 128
          %s1579 = scalar_lea.hbm %s11, %s1578
          %s1581 = sshll.u32 %s1570, 4
          %s1582 = int_to_ptr.vmem [resolvable:$true] %s1581
          %1584 = dma.vmem_to_hbm [thread:$0]  %s1582, 128, %s1579, %s1567
        $region96: #{tpu_custom_call.1} parent=63 // pred_fallthru
          _
      $region64: #{tpu_custom_call.1} parent=5 // pred_fallthru
        _
      %p1585 = scmp.le.s32.totalorder 2, %s28
      // Predicated region
      $region97: #{tpu_custom_call.1} parent=5 // pred_check
        %p1586 = pneg %p1585
      $region98: #{tpu_custom_call.1} parent=5 // pred_check_branch
        %1588 = sbr.rel (%p1586) target = $region100
      $region99: #{tpu_custom_call.1} parent=5 // pred_region
        %s1589 = ssub.s32 %s28, 2
        // Predicated region
        $region101: #{tpu_custom_call.1} parent=99 // pred_check
          %p1590 = pneg %p319
        $region102: #{tpu_custom_call.1} parent=99 // pred_check_branch
          %1592 = sbr.rel (%p1590) target = $region104
        $region103: #{tpu_custom_call.1} parent=99 // pred_region
          %s1593 = sand.u32 %s304, 1
          %s1594 = scalar_lea.sflag [#allocation4], %s1593
          %s1595 = sand.u32 %s304, 1
          %s1596 = smul.addr %s1595, 8
          %s1597 = scalar_lea.vmem [#allocation14], %s1596
          %1598 = dma.done %s1594, 128
        $region104: #{tpu_custom_call.1} parent=99 // pred_fallthru
          _
      $region100: #{tpu_custom_call.1} parent=5 // pred_fallthru
        _
    $region6: #{tpu_custom_call.1} parent=1 // loop_footer
      %s32 = sadd.s32 1, %s28
    $region7: #{tpu_custom_call.1} parent=1 // loop_footer_branch
      %27 = sbr.rel target = $region3
    $region8: #{tpu_custom_call.1} parent=1 // loop_exit
      _
    %1599 = vsyncpa [#allocation3], 1
    %s1600 = scalar_lea.sflag [#allocation3], 1
    %1601 = vsyncpa %s1600, 1
    %1602 = vsyncpa [#allocation6], 1
    %s1603 = scalar_lea.sflag [#allocation6], 1
    %1604 = vsyncpa %s1603, 1
    %1605 = vsyncpa [#allocation9], 1
    %1606 = vsyncpa [#allocation12], 1
    %1607 = vsyncpa [#allocation4], 1
    %s1608 = scalar_lea.sflag [#allocation4], 1
    %1609 = vsyncpa %s1608, 1

</llo_original>
